<compile_context>
chip_gen: v7x
topology: tpu7x:2x2x1
jax: 0.10.0
libtpu: 0.0.40
codegen_flags: <defaults>
</compile_context>

<pallas_src>
import functools
import math

import jax
import jax.numpy as jnp
from jax.experimental import pallas as pl
from jax.experimental.pallas import tpu as pltpu


def _slayer2_fused_kernel(x_ref, w1_ref, w2_ref, o_ref, *,
                          n_t, theta, a_s, c_s, a_r, c_r, inv_ts):
    """Fused fc1 -> psp -> spike -> fc2 -> psp -> spike for the whole batch.

    x_ref : (T, N*Fin)        input spikes, batch folded into lanes
    w1_ref: (N*Fin, N*Fh)     block-diagonal fc1 weight
    w2_ref: (N*Fh, N*Fout)    block-diagonal fc2 weight
    o_ref : (T, N*Fout)       output spikes
    """

    def slayer_layer(spikes_in, w):
        # dense (per-timestep linear) -> one lane-dense MXU matmul.
        # NOTE: keep f32 operands here; at these shapes the matmul is a
        # rounding error.  Cast to bf16 on v6e/v7x once the matmuls matter.
        y = jnp.dot(spikes_in, w, preferred_element_type=jnp.float32)
        width = y.shape[1]
        zero = jnp.zeros((1, width), jnp.float32)

        # Exact 2-state IIR states for the two alpha kernels:
        #   PSP:        eps(j) = c_s * j * a_s**j   (applied to dense output y)
        #   refractory: ref(j) = c_r * j * a_r**j   (applied to emitted spikes)
        p_s = q_s = zero          # PSP states
        p_r = q_r = zero          # refractory states

        rows = []
        for t in range(n_t):      # static trip count -> fully unrolled
            y_t = y[t:t + 1, :]                         # vreg slice, no vld
            u_t = c_s * p_s + c_r * p_r                 # membrane potential
            b_t = (u_t >= theta).astype(jnp.float32)    # binary spike decision
            rows.append(b_t * inv_ts)                   # SLAYER amplitude 1/Ts
            # advance PSP IIR with the current dense output row
            p_s = a_s * (p_s + q_s + y_t)
            q_s = a_s * (q_s + y_t)
            # advance refractory IIR with the emitted (binary) spike
            p_r = a_r * (p_r + q_r + b_t)
            q_r = a_r * (q_r + b_t)

        return jnp.concatenate(rows, axis=0)            # (T, width), stays in vregs

    spikes_hidden = slayer_layer(x_ref[...], w1_ref[...])    # fc1 -> psp -> spike
    o_ref[...] = slayer_layer(spikes_hidden, w2_ref[...])    # fc2 -> psp -> spike


def slayer_2layer_mlp(spike_input, w1, w2, *, theta, tau_sr, tau_ref, ts):
    """spike_input: (N, T, Fin); w1: (Fin, Fh); w2: (Fh, Fout) -> (N, T, Fout)."""
    n, n_t, f_in = spike_input.shape
    f_hid = w1.shape[1]
    f_out = w2.shape[1]

    # Lane-pack the batch: (N, T, Fin) -> (T, N*Fin).
    x2d = jnp.transpose(spike_input, (1, 0, 2)).reshape(n_t, n * f_in)
    # Block-diagonal weights so the per-batch dense stays one 2-D matmul.
    eye_n = jnp.eye(n, dtype=jnp.float32)
    w1b = jnp.kron(eye_n, w1.astype(jnp.float32))   # (N*Fin, N*Fh)
    w2b = jnp.kron(eye_n, w2.astype(jnp.float32))   # (N*Fh, N*Fout)

    # Alpha-kernel IIR coefficients:
    #   eps(j) = c_s * j * a_s**j,   ref(j) = c_r * j * a_r**j
    a_s = math.exp(-ts / tau_sr)
    c_s = math.e * ts / tau_sr
    a_r = math.exp(-ts / tau_ref)
    c_r = -2.0 * theta * math.e * ts / tau_ref

    kernel = functools.partial(
        _slayer2_fused_kernel, n_t=n_t, theta=theta,
        a_s=a_s, c_s=c_s, a_r=a_r, c_r=c_r, inv_ts=1.0 / ts)

    out2d = pl.pallas_call(
        kernel,
        out_shape=jax.ShapeDtypeStruct((n_t, n * f_out), jnp.float32),
        compiler_params=pltpu.CompilerParams(vmem_limit_bytes=32 * 1024 * 1024),
    )(x2d, w1b, w2b)

    # (T, N*Fout) -> (N, T, Fout)
    return jnp.transpose(out2d.reshape(n_t, n, f_out), (1, 0, 2))


if __name__ == "__main__":
    # Small, module-consistent shapes.
    N, T = 2, 16
    INPUT_SIZE, HIDDEN_SIZE, OUTPUT_SIZE = 64, 32, 16
    # Neuron / simulation params (params['neuron'], params['simulation']).
    THETA, TAU_SR, TAU_REF, TS = 0.25, 2.0, 2.0, 1.0

    key = jax.random.PRNGKey(0)
    k_in, k_w1, k_w2 = jax.random.split(key, 3)

    # Binary input spike train, layout (batch, time, features).
    spike_input = (jax.random.uniform(k_in, (N, T, INPUT_SIZE)) < 0.3).astype(jnp.float32)
    # Deterministic synthetic weights (SLAYER dense has no bias).
    w1 = (jax.random.normal(k_w1, (INPUT_SIZE, HIDDEN_SIZE)) * 0.1).astype(jnp.float32)
    w2 = (jax.random.normal(k_w2, (HIDDEN_SIZE, OUTPUT_SIZE)) * 0.1).astype(jnp.float32)

    spike_out = slayer_2layer_mlp(spike_input, w1, w2,
                                  theta=THETA, tau_sr=TAU_SR,
                                  tau_ref=TAU_REF, ts=TS)
    spike_out = jax.block_until_ready(spike_out)

    assert spike_out.shape == (N, T, OUTPUT_SIZE)
    assert bool(jnp.all(jnp.isfinite(spike_out)))
    # Spikes must be exactly 0 or 1/Ts.
    assert bool(jnp.all((spike_out == 0.0) | (spike_out == 1.0 / TS)))
    print("KERNEL_OK")
</pallas_src>

<mosaic_0001>
module attributes {stable_mosaic.version = 11 : i64} {
  func.func @_slayer2_fused_kernel(%arg0: memref<16x128xf32, #tpu.memory_space<vmem>>, %arg1: memref<128x64xf32, #tpu.memory_space<vmem>>, %arg2: memref<64x32xf32, #tpu.memory_space<vmem>>, %arg3: memref<16x32xf32, #tpu.memory_space<vmem>>) attributes {dimension_semantics = [], scalar_prefetch = 0 : i64, scratch_operands = 0 : i64, tpu.core_type = #tpu.core_type<tc>} {
    %c0 = arith.constant 0 : index
    %c0_0 = arith.constant 0 : index
    %0 = vector.load %arg0[%c0, %c0_0] : memref<16x128xf32, #tpu.memory_space<vmem>>, vector<16x128xf32>
    %c0_1 = arith.constant 0 : index
    %c0_2 = arith.constant 0 : index
    %1 = vector.load %arg1[%c0_1, %c0_2] : memref<128x64xf32, #tpu.memory_space<vmem>>, vector<128x64xf32>
    %cst = arith.constant dense<0.000000e+00> : vector<16x64xf32>
    %2 = tpu.matmul %0, %1, %cst {dimension_numbers = #tpu.dot_dimension_numbers<[1], [0], [0], [1], [0, 0, 1, 1], [], []>} : vector<16x128xf32>, vector<128x64xf32>, vector<16x64xf32> -> vector<16x64xf32>
    %cst_3 = arith.constant 0.000000e+00 : f32
    %3 = vector.broadcast %cst_3 : f32 to vector<1x64xf32>
    %4 = vector.extract_strided_slice %2 {offsets = [0, 0], sizes = [1, 64], strides = [1, 1]} : vector<16x64xf32> to vector<1x64xf32>
    %cst_4 = arith.constant 1.35914087 : f32
    %5 = vector.broadcast %cst_4 : f32 to vector<1x64xf32>
    %6 = arith.mulf %5, %3 : vector<1x64xf32>
    %cst_5 = arith.constant -0.679570436 : f32
    %7 = vector.broadcast %cst_5 : f32 to vector<1x64xf32>
    %8 = arith.mulf %7, %3 : vector<1x64xf32>
    %9 = arith.addf %6, %8 : vector<1x64xf32>
    %cst_6 = arith.constant 2.500000e-01 : f32
    %10 = vector.broadcast %cst_6 : f32 to vector<1x64xf32>
    %11 = arith.cmpf oge, %9, %10 : vector<1x64xf32>
    %12 = arith.extui %11 : vector<1x64xi1> to vector<1x64xi32>
    %13 = arith.sitofp %12 : vector<1x64xi32> to vector<1x64xf32>
    %cst_7 = arith.constant 1.000000e+00 : f32
    %14 = vector.broadcast %cst_7 : f32 to vector<1x64xf32>
    %15 = arith.mulf %13, %14 : vector<1x64xf32>
    %16 = arith.addf %3, %3 : vector<1x64xf32>
    %17 = arith.addf %16, %4 : vector<1x64xf32>
    %cst_8 = arith.constant 0.606530666 : f32
    %18 = vector.broadcast %cst_8 : f32 to vector<1x64xf32>
    %19 = arith.mulf %18, %17 : vector<1x64xf32>
    %20 = arith.addf %3, %4 : vector<1x64xf32>
    %cst_9 = arith.constant 0.606530666 : f32
    %21 = vector.broadcast %cst_9 : f32 to vector<1x64xf32>
    %22 = arith.mulf %21, %20 : vector<1x64xf32>
    %23 = arith.addf %3, %3 : vector<1x64xf32>
    %24 = arith.addf %23, %13 : vector<1x64xf32>
    %cst_10 = arith.constant 0.606530666 : f32
    %25 = vector.broadcast %cst_10 : f32 to vector<1x64xf32>
    %26 = arith.mulf %25, %24 : vector<1x64xf32>
    %27 = arith.addf %3, %13 : vector<1x64xf32>
    %cst_11 = arith.constant 0.606530666 : f32
    %28 = vector.broadcast %cst_11 : f32 to vector<1x64xf32>
    %29 = arith.mulf %28, %27 : vector<1x64xf32>
    %30 = vector.extract_strided_slice %2 {offsets = [1, 0], sizes = [1, 64], strides = [1, 1]} : vector<16x64xf32> to vector<1x64xf32>
    %cst_12 = arith.constant 1.35914087 : f32
    %31 = vector.broadcast %cst_12 : f32 to vector<1x64xf32>
    %32 = arith.mulf %31, %19 : vector<1x64xf32>
    %cst_13 = arith.constant -0.679570436 : f32
    %33 = vector.broadcast %cst_13 : f32 to vector<1x64xf32>
    %34 = arith.mulf %33, %26 : vector<1x64xf32>
    %35 = arith.addf %32, %34 : vector<1x64xf32>
    %cst_14 = arith.constant 2.500000e-01 : f32
    %36 = vector.broadcast %cst_14 : f32 to vector<1x64xf32>
    %37 = arith.cmpf oge, %35, %36 : vector<1x64xf32>
    %38 = arith.extui %37 : vector<1x64xi1> to vector<1x64xi32>
    %39 = arith.sitofp %38 : vector<1x64xi32> to vector<1x64xf32>
    %cst_15 = arith.constant 1.000000e+00 : f32
    %40 = vector.broadcast %cst_15 : f32 to vector<1x64xf32>
    %41 = arith.mulf %39, %40 : vector<1x64xf32>
    %42 = arith.addf %19, %22 : vector<1x64xf32>
    %43 = arith.addf %42, %30 : vector<1x64xf32>
    %cst_16 = arith.constant 0.606530666 : f32
    %44 = vector.broadcast %cst_16 : f32 to vector<1x64xf32>
    %45 = arith.mulf %44, %43 : vector<1x64xf32>
    %46 = arith.addf %22, %30 : vector<1x64xf32>
    %cst_17 = arith.constant 0.606530666 : f32
    %47 = vector.broadcast %cst_17 : f32 to vector<1x64xf32>
    %48 = arith.mulf %47, %46 : vector<1x64xf32>
    %49 = arith.addf %26, %29 : vector<1x64xf32>
    %50 = arith.addf %49, %39 : vector<1x64xf32>
    %cst_18 = arith.constant 0.606530666 : f32
    %51 = vector.broadcast %cst_18 : f32 to vector<1x64xf32>
    %52 = arith.mulf %51, %50 : vector<1x64xf32>
    %53 = arith.addf %29, %39 : vector<1x64xf32>
    %cst_19 = arith.constant 0.606530666 : f32
    %54 = vector.broadcast %cst_19 : f32 to vector<1x64xf32>
    %55 = arith.mulf %54, %53 : vector<1x64xf32>
    %56 = vector.extract_strided_slice %2 {offsets = [2, 0], sizes = [1, 64], strides = [1, 1]} : vector<16x64xf32> to vector<1x64xf32>
    %cst_20 = arith.constant 1.35914087 : f32
    %57 = vector.broadcast %cst_20 : f32 to vector<1x64xf32>
    %58 = arith.mulf %57, %45 : vector<1x64xf32>
    %cst_21 = arith.constant -0.679570436 : f32
    %59 = vector.broadcast %cst_21 : f32 to vector<1x64xf32>
    %60 = arith.mulf %59, %52 : vector<1x64xf32>
    %61 = arith.addf %58, %60 : vector<1x64xf32>
    %cst_22 = arith.constant 2.500000e-01 : f32
    %62 = vector.broadcast %cst_22 : f32 to vector<1x64xf32>
    %63 = arith.cmpf oge, %61, %62 : vector<1x64xf32>
    %64 = arith.extui %63 : vector<1x64xi1> to vector<1x64xi32>
    %65 = arith.sitofp %64 : vector<1x64xi32> to vector<1x64xf32>
    %cst_23 = arith.constant 1.000000e+00 : f32
    %66 = vector.broadcast %cst_23 : f32 to vector<1x64xf32>
    %67 = arith.mulf %65, %66 : vector<1x64xf32>
    %68 = arith.addf %45, %48 : vector<1x64xf32>
    %69 = arith.addf %68, %56 : vector<1x64xf32>
    %cst_24 = arith.constant 0.606530666 : f32
    %70 = vector.broadcast %cst_24 : f32 to vector<1x64xf32>
    %71 = arith.mulf %70, %69 : vector<1x64xf32>
    %72 = arith.addf %48, %56 : vector<1x64xf32>
    %cst_25 = arith.constant 0.606530666 : f32
    %73 = vector.broadcast %cst_25 : f32 to vector<1x64xf32>
    %74 = arith.mulf %73, %72 : vector<1x64xf32>
    %75 = arith.addf %52, %55 : vector<1x64xf32>
    %76 = arith.addf %75, %65 : vector<1x64xf32>
    %cst_26 = arith.constant 0.606530666 : f32
    %77 = vector.broadcast %cst_26 : f32 to vector<1x64xf32>
    %78 = arith.mulf %77, %76 : vector<1x64xf32>
    %79 = arith.addf %55, %65 : vector<1x64xf32>
    %cst_27 = arith.constant 0.606530666 : f32
    %80 = vector.broadcast %cst_27 : f32 to vector<1x64xf32>
    %81 = arith.mulf %80, %79 : vector<1x64xf32>
    %82 = vector.extract_strided_slice %2 {offsets = [3, 0], sizes = [1, 64], strides = [1, 1]} : vector<16x64xf32> to vector<1x64xf32>
    %cst_28 = arith.constant 1.35914087 : f32
    %83 = vector.broadcast %cst_28 : f32 to vector<1x64xf32>
    %84 = arith.mulf %83, %71 : vector<1x64xf32>
    %cst_29 = arith.constant -0.679570436 : f32
    %85 = vector.broadcast %cst_29 : f32 to vector<1x64xf32>
    %86 = arith.mulf %85, %78 : vector<1x64xf32>
    %87 = arith.addf %84, %86 : vector<1x64xf32>
    %cst_30 = arith.constant 2.500000e-01 : f32
    %88 = vector.broadcast %cst_30 : f32 to vector<1x64xf32>
    %89 = arith.cmpf oge, %87, %88 : vector<1x64xf32>
    %90 = arith.extui %89 : vector<1x64xi1> to vector<1x64xi32>
    %91 = arith.sitofp %90 : vector<1x64xi32> to vector<1x64xf32>
    %cst_31 = arith.constant 1.000000e+00 : f32
    %92 = vector.broadcast %cst_31 : f32 to vector<1x64xf32>
    %93 = arith.mulf %91, %92 : vector<1x64xf32>
    %94 = arith.addf %71, %74 : vector<1x64xf32>
    %95 = arith.addf %94, %82 : vector<1x64xf32>
    %cst_32 = arith.constant 0.606530666 : f32
    %96 = vector.broadcast %cst_32 : f32 to vector<1x64xf32>
    %97 = arith.mulf %96, %95 : vector<1x64xf32>
    %98 = arith.addf %74, %82 : vector<1x64xf32>
    %cst_33 = arith.constant 0.606530666 : f32
    %99 = vector.broadcast %cst_33 : f32 to vector<1x64xf32>
    %100 = arith.mulf %99, %98 : vector<1x64xf32>
    %101 = arith.addf %78, %81 : vector<1x64xf32>
    %102 = arith.addf %101, %91 : vector<1x64xf32>
    %cst_34 = arith.constant 0.606530666 : f32
    %103 = vector.broadcast %cst_34 : f32 to vector<1x64xf32>
    %104 = arith.mulf %103, %102 : vector<1x64xf32>
    %105 = arith.addf %81, %91 : vector<1x64xf32>
    %cst_35 = arith.constant 0.606530666 : f32
    %106 = vector.broadcast %cst_35 : f32 to vector<1x64xf32>
    %107 = arith.mulf %106, %105 : vector<1x64xf32>
    %108 = vector.extract_strided_slice %2 {offsets = [4, 0], sizes = [1, 64], strides = [1, 1]} : vector<16x64xf32> to vector<1x64xf32>
    %cst_36 = arith.constant 1.35914087 : f32
    %109 = vector.broadcast %cst_36 : f32 to vector<1x64xf32>
    %110 = arith.mulf %109, %97 : vector<1x64xf32>
    %cst_37 = arith.constant -0.679570436 : f32
    %111 = vector.broadcast %cst_37 : f32 to vector<1x64xf32>
    %112 = arith.mulf %111, %104 : vector<1x64xf32>
    %113 = arith.addf %110, %112 : vector<1x64xf32>
    %cst_38 = arith.constant 2.500000e-01 : f32
    %114 = vector.broadcast %cst_38 : f32 to vector<1x64xf32>
    %115 = arith.cmpf oge, %113, %114 : vector<1x64xf32>
    %116 = arith.extui %115 : vector<1x64xi1> to vector<1x64xi32>
    %117 = arith.sitofp %116 : vector<1x64xi32> to vector<1x64xf32>
    %cst_39 = arith.constant 1.000000e+00 : f32
    %118 = vector.broadcast %cst_39 : f32 to vector<1x64xf32>
    %119 = arith.mulf %117, %118 : vector<1x64xf32>
    %120 = arith.addf %97, %100 : vector<1x64xf32>
    %121 = arith.addf %120, %108 : vector<1x64xf32>
    %cst_40 = arith.constant 0.606530666 : f32
    %122 = vector.broadcast %cst_40 : f32 to vector<1x64xf32>
    %123 = arith.mulf %122, %121 : vector<1x64xf32>
    %124 = arith.addf %100, %108 : vector<1x64xf32>
    %cst_41 = arith.constant 0.606530666 : f32
    %125 = vector.broadcast %cst_41 : f32 to vector<1x64xf32>
    %126 = arith.mulf %125, %124 : vector<1x64xf32>
    %127 = arith.addf %104, %107 : vector<1x64xf32>
    %128 = arith.addf %127, %117 : vector<1x64xf32>
    %cst_42 = arith.constant 0.606530666 : f32
    %129 = vector.broadcast %cst_42 : f32 to vector<1x64xf32>
    %130 = arith.mulf %129, %128 : vector<1x64xf32>
    %131 = arith.addf %107, %117 : vector<1x64xf32>
    %cst_43 = arith.constant 0.606530666 : f32
    %132 = vector.broadcast %cst_43 : f32 to vector<1x64xf32>
    %133 = arith.mulf %132, %131 : vector<1x64xf32>
    %134 = vector.extract_strided_slice %2 {offsets = [5, 0], sizes = [1, 64], strides = [1, 1]} : vector<16x64xf32> to vector<1x64xf32>
    %cst_44 = arith.constant 1.35914087 : f32
    %135 = vector.broadcast %cst_44 : f32 to vector<1x64xf32>
    %136 = arith.mulf %135, %123 : vector<1x64xf32>
    %cst_45 = arith.constant -0.679570436 : f32
    %137 = vector.broadcast %cst_45 : f32 to vector<1x64xf32>
    %138 = arith.mulf %137, %130 : vector<1x64xf32>
    %139 = arith.addf %136, %138 : vector<1x64xf32>
    %cst_46 = arith.constant 2.500000e-01 : f32
    %140 = vector.broadcast %cst_46 : f32 to vector<1x64xf32>
    %141 = arith.cmpf oge, %139, %140 : vector<1x64xf32>
    %142 = arith.extui %141 : vector<1x64xi1> to vector<1x64xi32>
    %143 = arith.sitofp %142 : vector<1x64xi32> to vector<1x64xf32>
    %cst_47 = arith.constant 1.000000e+00 : f32
    %144 = vector.broadcast %cst_47 : f32 to vector<1x64xf32>
    %145 = arith.mulf %143, %144 : vector<1x64xf32>
    %146 = arith.addf %123, %126 : vector<1x64xf32>
    %147 = arith.addf %146, %134 : vector<1x64xf32>
    %cst_48 = arith.constant 0.606530666 : f32
    %148 = vector.broadcast %cst_48 : f32 to vector<1x64xf32>
    %149 = arith.mulf %148, %147 : vector<1x64xf32>
    %150 = arith.addf %126, %134 : vector<1x64xf32>
    %cst_49 = arith.constant 0.606530666 : f32
    %151 = vector.broadcast %cst_49 : f32 to vector<1x64xf32>
    %152 = arith.mulf %151, %150 : vector<1x64xf32>
    %153 = arith.addf %130, %133 : vector<1x64xf32>
    %154 = arith.addf %153, %143 : vector<1x64xf32>
    %cst_50 = arith.constant 0.606530666 : f32
    %155 = vector.broadcast %cst_50 : f32 to vector<1x64xf32>
    %156 = arith.mulf %155, %154 : vector<1x64xf32>
    %157 = arith.addf %133, %143 : vector<1x64xf32>
    %cst_51 = arith.constant 0.606530666 : f32
    %158 = vector.broadcast %cst_51 : f32 to vector<1x64xf32>
    %159 = arith.mulf %158, %157 : vector<1x64xf32>
    %160 = vector.extract_strided_slice %2 {offsets = [6, 0], sizes = [1, 64], strides = [1, 1]} : vector<16x64xf32> to vector<1x64xf32>
    %cst_52 = arith.constant 1.35914087 : f32
    %161 = vector.broadcast %cst_52 : f32 to vector<1x64xf32>
    %162 = arith.mulf %161, %149 : vector<1x64xf32>
    %cst_53 = arith.constant -0.679570436 : f32
    %163 = vector.broadcast %cst_53 : f32 to vector<1x64xf32>
    %164 = arith.mulf %163, %156 : vector<1x64xf32>
    %165 = arith.addf %162, %164 : vector<1x64xf32>
    %cst_54 = arith.constant 2.500000e-01 : f32
    %166 = vector.broadcast %cst_54 : f32 to vector<1x64xf32>
    %167 = arith.cmpf oge, %165, %166 : vector<1x64xf32>
    %168 = arith.extui %167 : vector<1x64xi1> to vector<1x64xi32>
    %169 = arith.sitofp %168 : vector<1x64xi32> to vector<1x64xf32>
    %cst_55 = arith.constant 1.000000e+00 : f32
    %170 = vector.broadcast %cst_55 : f32 to vector<1x64xf32>
    %171 = arith.mulf %169, %170 : vector<1x64xf32>
    %172 = arith.addf %149, %152 : vector<1x64xf32>
    %173 = arith.addf %172, %160 : vector<1x64xf32>
    %cst_56 = arith.constant 0.606530666 : f32
    %174 = vector.broadcast %cst_56 : f32 to vector<1x64xf32>
    %175 = arith.mulf %174, %173 : vector<1x64xf32>
    %176 = arith.addf %152, %160 : vector<1x64xf32>
    %cst_57 = arith.constant 0.606530666 : f32
    %177 = vector.broadcast %cst_57 : f32 to vector<1x64xf32>
    %178 = arith.mulf %177, %176 : vector<1x64xf32>
    %179 = arith.addf %156, %159 : vector<1x64xf32>
    %180 = arith.addf %179, %169 : vector<1x64xf32>
    %cst_58 = arith.constant 0.606530666 : f32
    %181 = vector.broadcast %cst_58 : f32 to vector<1x64xf32>
    %182 = arith.mulf %181, %180 : vector<1x64xf32>
    %183 = arith.addf %159, %169 : vector<1x64xf32>
    %cst_59 = arith.constant 0.606530666 : f32
    %184 = vector.broadcast %cst_59 : f32 to vector<1x64xf32>
    %185 = arith.mulf %184, %183 : vector<1x64xf32>
    %186 = vector.extract_strided_slice %2 {offsets = [7, 0], sizes = [1, 64], strides = [1, 1]} : vector<16x64xf32> to vector<1x64xf32>
    %cst_60 = arith.constant 1.35914087 : f32
    %187 = vector.broadcast %cst_60 : f32 to vector<1x64xf32>
    %188 = arith.mulf %187, %175 : vector<1x64xf32>
    %cst_61 = arith.constant -0.679570436 : f32
    %189 = vector.broadcast %cst_61 : f32 to vector<1x64xf32>
    %190 = arith.mulf %189, %182 : vector<1x64xf32>
    %191 = arith.addf %188, %190 : vector<1x64xf32>
    %cst_62 = arith.constant 2.500000e-01 : f32
    %192 = vector.broadcast %cst_62 : f32 to vector<1x64xf32>
    %193 = arith.cmpf oge, %191, %192 : vector<1x64xf32>
    %194 = arith.extui %193 : vector<1x64xi1> to vector<1x64xi32>
    %195 = arith.sitofp %194 : vector<1x64xi32> to vector<1x64xf32>
    %cst_63 = arith.constant 1.000000e+00 : f32
    %196 = vector.broadcast %cst_63 : f32 to vector<1x64xf32>
    %197 = arith.mulf %195, %196 : vector<1x64xf32>
    %198 = arith.addf %175, %178 : vector<1x64xf32>
    %199 = arith.addf %198, %186 : vector<1x64xf32>
    %cst_64 = arith.constant 0.606530666 : f32
    %200 = vector.broadcast %cst_64 : f32 to vector<1x64xf32>
    %201 = arith.mulf %200, %199 : vector<1x64xf32>
    %202 = arith.addf %178, %186 : vector<1x64xf32>
    %cst_65 = arith.constant 0.606530666 : f32
    %203 = vector.broadcast %cst_65 : f32 to vector<1x64xf32>
    %204 = arith.mulf %203, %202 : vector<1x64xf32>
    %205 = arith.addf %182, %185 : vector<1x64xf32>
    %206 = arith.addf %205, %195 : vector<1x64xf32>
    %cst_66 = arith.constant 0.606530666 : f32
    %207 = vector.broadcast %cst_66 : f32 to vector<1x64xf32>
    %208 = arith.mulf %207, %206 : vector<1x64xf32>
    %209 = arith.addf %185, %195 : vector<1x64xf32>
    %cst_67 = arith.constant 0.606530666 : f32
    %210 = vector.broadcast %cst_67 : f32 to vector<1x64xf32>
    %211 = arith.mulf %210, %209 : vector<1x64xf32>
    %212 = vector.extract_strided_slice %2 {offsets = [8, 0], sizes = [1, 64], strides = [1, 1]} : vector<16x64xf32> to vector<1x64xf32>
    %cst_68 = arith.constant 1.35914087 : f32
    %213 = vector.broadcast %cst_68 : f32 to vector<1x64xf32>
    %214 = arith.mulf %213, %201 : vector<1x64xf32>
    %cst_69 = arith.constant -0.679570436 : f32
    %215 = vector.broadcast %cst_69 : f32 to vector<1x64xf32>
    %216 = arith.mulf %215, %208 : vector<1x64xf32>
    %217 = arith.addf %214, %216 : vector<1x64xf32>
    %cst_70 = arith.constant 2.500000e-01 : f32
    %218 = vector.broadcast %cst_70 : f32 to vector<1x64xf32>
    %219 = arith.cmpf oge, %217, %218 : vector<1x64xf32>
    %220 = arith.extui %219 : vector<1x64xi1> to vector<1x64xi32>
    %221 = arith.sitofp %220 : vector<1x64xi32> to vector<1x64xf32>
    %cst_71 = arith.constant 1.000000e+00 : f32
    %222 = vector.broadcast %cst_71 : f32 to vector<1x64xf32>
    %223 = arith.mulf %221, %222 : vector<1x64xf32>
    %224 = arith.addf %201, %204 : vector<1x64xf32>
    %225 = arith.addf %224, %212 : vector<1x64xf32>
    %cst_72 = arith.constant 0.606530666 : f32
    %226 = vector.broadcast %cst_72 : f32 to vector<1x64xf32>
    %227 = arith.mulf %226, %225 : vector<1x64xf32>
    %228 = arith.addf %204, %212 : vector<1x64xf32>
    %cst_73 = arith.constant 0.606530666 : f32
    %229 = vector.broadcast %cst_73 : f32 to vector<1x64xf32>
    %230 = arith.mulf %229, %228 : vector<1x64xf32>
    %231 = arith.addf %208, %211 : vector<1x64xf32>
    %232 = arith.addf %231, %221 : vector<1x64xf32>
    %cst_74 = arith.constant 0.606530666 : f32
    %233 = vector.broadcast %cst_74 : f32 to vector<1x64xf32>
    %234 = arith.mulf %233, %232 : vector<1x64xf32>
    %235 = arith.addf %211, %221 : vector<1x64xf32>
    %cst_75 = arith.constant 0.606530666 : f32
    %236 = vector.broadcast %cst_75 : f32 to vector<1x64xf32>
    %237 = arith.mulf %236, %235 : vector<1x64xf32>
    %238 = vector.extract_strided_slice %2 {offsets = [9, 0], sizes = [1, 64], strides = [1, 1]} : vector<16x64xf32> to vector<1x64xf32>
    %cst_76 = arith.constant 1.35914087 : f32
    %239 = vector.broadcast %cst_76 : f32 to vector<1x64xf32>
    %240 = arith.mulf %239, %227 : vector<1x64xf32>
    %cst_77 = arith.constant -0.679570436 : f32
    %241 = vector.broadcast %cst_77 : f32 to vector<1x64xf32>
    %242 = arith.mulf %241, %234 : vector<1x64xf32>
    %243 = arith.addf %240, %242 : vector<1x64xf32>
    %cst_78 = arith.constant 2.500000e-01 : f32
    %244 = vector.broadcast %cst_78 : f32 to vector<1x64xf32>
    %245 = arith.cmpf oge, %243, %244 : vector<1x64xf32>
    %246 = arith.extui %245 : vector<1x64xi1> to vector<1x64xi32>
    %247 = arith.sitofp %246 : vector<1x64xi32> to vector<1x64xf32>
    %cst_79 = arith.constant 1.000000e+00 : f32
    %248 = vector.broadcast %cst_79 : f32 to vector<1x64xf32>
    %249 = arith.mulf %247, %248 : vector<1x64xf32>
    %250 = arith.addf %227, %230 : vector<1x64xf32>
    %251 = arith.addf %250, %238 : vector<1x64xf32>
    %cst_80 = arith.constant 0.606530666 : f32
    %252 = vector.broadcast %cst_80 : f32 to vector<1x64xf32>
    %253 = arith.mulf %252, %251 : vector<1x64xf32>
    %254 = arith.addf %230, %238 : vector<1x64xf32>
    %cst_81 = arith.constant 0.606530666 : f32
    %255 = vector.broadcast %cst_81 : f32 to vector<1x64xf32>
    %256 = arith.mulf %255, %254 : vector<1x64xf32>
    %257 = arith.addf %234, %237 : vector<1x64xf32>
    %258 = arith.addf %257, %247 : vector<1x64xf32>
    %cst_82 = arith.constant 0.606530666 : f32
    %259 = vector.broadcast %cst_82 : f32 to vector<1x64xf32>
    %260 = arith.mulf %259, %258 : vector<1x64xf32>
    %261 = arith.addf %237, %247 : vector<1x64xf32>
    %cst_83 = arith.constant 0.606530666 : f32
    %262 = vector.broadcast %cst_83 : f32 to vector<1x64xf32>
    %263 = arith.mulf %262, %261 : vector<1x64xf32>
    %264 = vector.extract_strided_slice %2 {offsets = [10, 0], sizes = [1, 64], strides = [1, 1]} : vector<16x64xf32> to vector<1x64xf32>
    %cst_84 = arith.constant 1.35914087 : f32
    %265 = vector.broadcast %cst_84 : f32 to vector<1x64xf32>
    %266 = arith.mulf %265, %253 : vector<1x64xf32>
    %cst_85 = arith.constant -0.679570436 : f32
    %267 = vector.broadcast %cst_85 : f32 to vector<1x64xf32>
    %268 = arith.mulf %267, %260 : vector<1x64xf32>
    %269 = arith.addf %266, %268 : vector<1x64xf32>
    %cst_86 = arith.constant 2.500000e-01 : f32
    %270 = vector.broadcast %cst_86 : f32 to vector<1x64xf32>
    %271 = arith.cmpf oge, %269, %270 : vector<1x64xf32>
    %272 = arith.extui %271 : vector<1x64xi1> to vector<1x64xi32>
    %273 = arith.sitofp %272 : vector<1x64xi32> to vector<1x64xf32>
    %cst_87 = arith.constant 1.000000e+00 : f32
    %274 = vector.broadcast %cst_87 : f32 to vector<1x64xf32>
    %275 = arith.mulf %273, %274 : vector<1x64xf32>
    %276 = arith.addf %253, %256 : vector<1x64xf32>
    %277 = arith.addf %276, %264 : vector<1x64xf32>
    %cst_88 = arith.constant 0.606530666 : f32
    %278 = vector.broadcast %cst_88 : f32 to vector<1x64xf32>
    %279 = arith.mulf %278, %277 : vector<1x64xf32>
    %280 = arith.addf %256, %264 : vector<1x64xf32>
    %cst_89 = arith.constant 0.606530666 : f32
    %281 = vector.broadcast %cst_89 : f32 to vector<1x64xf32>
    %282 = arith.mulf %281, %280 : vector<1x64xf32>
    %283 = arith.addf %260, %263 : vector<1x64xf32>
    %284 = arith.addf %283, %273 : vector<1x64xf32>
    %cst_90 = arith.constant 0.606530666 : f32
    %285 = vector.broadcast %cst_90 : f32 to vector<1x64xf32>
    %286 = arith.mulf %285, %284 : vector<1x64xf32>
    %287 = arith.addf %263, %273 : vector<1x64xf32>
    %cst_91 = arith.constant 0.606530666 : f32
    %288 = vector.broadcast %cst_91 : f32 to vector<1x64xf32>
    %289 = arith.mulf %288, %287 : vector<1x64xf32>
    %290 = vector.extract_strided_slice %2 {offsets = [11, 0], sizes = [1, 64], strides = [1, 1]} : vector<16x64xf32> to vector<1x64xf32>
    %cst_92 = arith.constant 1.35914087 : f32
    %291 = vector.broadcast %cst_92 : f32 to vector<1x64xf32>
    %292 = arith.mulf %291, %279 : vector<1x64xf32>
    %cst_93 = arith.constant -0.679570436 : f32
    %293 = vector.broadcast %cst_93 : f32 to vector<1x64xf32>
    %294 = arith.mulf %293, %286 : vector<1x64xf32>
    %295 = arith.addf %292, %294 : vector<1x64xf32>
    %cst_94 = arith.constant 2.500000e-01 : f32
    %296 = vector.broadcast %cst_94 : f32 to vector<1x64xf32>
    %297 = arith.cmpf oge, %295, %296 : vector<1x64xf32>
    %298 = arith.extui %297 : vector<1x64xi1> to vector<1x64xi32>
    %299 = arith.sitofp %298 : vector<1x64xi32> to vector<1x64xf32>
    %cst_95 = arith.constant 1.000000e+00 : f32
    %300 = vector.broadcast %cst_95 : f32 to vector<1x64xf32>
    %301 = arith.mulf %299, %300 : vector<1x64xf32>
    %302 = arith.addf %279, %282 : vector<1x64xf32>
    %303 = arith.addf %302, %290 : vector<1x64xf32>
    %cst_96 = arith.constant 0.606530666 : f32
    %304 = vector.broadcast %cst_96 : f32 to vector<1x64xf32>
    %305 = arith.mulf %304, %303 : vector<1x64xf32>
    %306 = arith.addf %282, %290 : vector<1x64xf32>
    %cst_97 = arith.constant 0.606530666 : f32
    %307 = vector.broadcast %cst_97 : f32 to vector<1x64xf32>
    %308 = arith.mulf %307, %306 : vector<1x64xf32>
    %309 = arith.addf %286, %289 : vector<1x64xf32>
    %310 = arith.addf %309, %299 : vector<1x64xf32>
    %cst_98 = arith.constant 0.606530666 : f32
    %311 = vector.broadcast %cst_98 : f32 to vector<1x64xf32>
    %312 = arith.mulf %311, %310 : vector<1x64xf32>
    %313 = arith.addf %289, %299 : vector<1x64xf32>
    %cst_99 = arith.constant 0.606530666 : f32
    %314 = vector.broadcast %cst_99 : f32 to vector<1x64xf32>
    %315 = arith.mulf %314, %313 : vector<1x64xf32>
    %316 = vector.extract_strided_slice %2 {offsets = [12, 0], sizes = [1, 64], strides = [1, 1]} : vector<16x64xf32> to vector<1x64xf32>
    %cst_100 = arith.constant 1.35914087 : f32
    %317 = vector.broadcast %cst_100 : f32 to vector<1x64xf32>
    %318 = arith.mulf %317, %305 : vector<1x64xf32>
    %cst_101 = arith.constant -0.679570436 : f32
    %319 = vector.broadcast %cst_101 : f32 to vector<1x64xf32>
    %320 = arith.mulf %319, %312 : vector<1x64xf32>
    %321 = arith.addf %318, %320 : vector<1x64xf32>
    %cst_102 = arith.constant 2.500000e-01 : f32
    %322 = vector.broadcast %cst_102 : f32 to vector<1x64xf32>
    %323 = arith.cmpf oge, %321, %322 : vector<1x64xf32>
    %324 = arith.extui %323 : vector<1x64xi1> to vector<1x64xi32>
    %325 = arith.sitofp %324 : vector<1x64xi32> to vector<1x64xf32>
    %cst_103 = arith.constant 1.000000e+00 : f32
    %326 = vector.broadcast %cst_103 : f32 to vector<1x64xf32>
    %327 = arith.mulf %325, %326 : vector<1x64xf32>
    %328 = arith.addf %305, %308 : vector<1x64xf32>
    %329 = arith.addf %328, %316 : vector<1x64xf32>
    %cst_104 = arith.constant 0.606530666 : f32
    %330 = vector.broadcast %cst_104 : f32 to vector<1x64xf32>
    %331 = arith.mulf %330, %329 : vector<1x64xf32>
    %332 = arith.addf %308, %316 : vector<1x64xf32>
    %cst_105 = arith.constant 0.606530666 : f32
    %333 = vector.broadcast %cst_105 : f32 to vector<1x64xf32>
    %334 = arith.mulf %333, %332 : vector<1x64xf32>
    %335 = arith.addf %312, %315 : vector<1x64xf32>
    %336 = arith.addf %335, %325 : vector<1x64xf32>
    %cst_106 = arith.constant 0.606530666 : f32
    %337 = vector.broadcast %cst_106 : f32 to vector<1x64xf32>
    %338 = arith.mulf %337, %336 : vector<1x64xf32>
    %339 = arith.addf %315, %325 : vector<1x64xf32>
    %cst_107 = arith.constant 0.606530666 : f32
    %340 = vector.broadcast %cst_107 : f32 to vector<1x64xf32>
    %341 = arith.mulf %340, %339 : vector<1x64xf32>
    %342 = vector.extract_strided_slice %2 {offsets = [13, 0], sizes = [1, 64], strides = [1, 1]} : vector<16x64xf32> to vector<1x64xf32>
    %cst_108 = arith.constant 1.35914087 : f32
    %343 = vector.broadcast %cst_108 : f32 to vector<1x64xf32>
    %344 = arith.mulf %343, %331 : vector<1x64xf32>
    %cst_109 = arith.constant -0.679570436 : f32
    %345 = vector.broadcast %cst_109 : f32 to vector<1x64xf32>
    %346 = arith.mulf %345, %338 : vector<1x64xf32>
    %347 = arith.addf %344, %346 : vector<1x64xf32>
    %cst_110 = arith.constant 2.500000e-01 : f32
    %348 = vector.broadcast %cst_110 : f32 to vector<1x64xf32>
    %349 = arith.cmpf oge, %347, %348 : vector<1x64xf32>
    %350 = arith.extui %349 : vector<1x64xi1> to vector<1x64xi32>
    %351 = arith.sitofp %350 : vector<1x64xi32> to vector<1x64xf32>
    %cst_111 = arith.constant 1.000000e+00 : f32
    %352 = vector.broadcast %cst_111 : f32 to vector<1x64xf32>
    %353 = arith.mulf %351, %352 : vector<1x64xf32>
    %354 = arith.addf %331, %334 : vector<1x64xf32>
    %355 = arith.addf %354, %342 : vector<1x64xf32>
    %cst_112 = arith.constant 0.606530666 : f32
    %356 = vector.broadcast %cst_112 : f32 to vector<1x64xf32>
    %357 = arith.mulf %356, %355 : vector<1x64xf32>
    %358 = arith.addf %334, %342 : vector<1x64xf32>
    %cst_113 = arith.constant 0.606530666 : f32
    %359 = vector.broadcast %cst_113 : f32 to vector<1x64xf32>
    %360 = arith.mulf %359, %358 : vector<1x64xf32>
    %361 = arith.addf %338, %341 : vector<1x64xf32>
    %362 = arith.addf %361, %351 : vector<1x64xf32>
    %cst_114 = arith.constant 0.606530666 : f32
    %363 = vector.broadcast %cst_114 : f32 to vector<1x64xf32>
    %364 = arith.mulf %363, %362 : vector<1x64xf32>
    %365 = arith.addf %341, %351 : vector<1x64xf32>
    %cst_115 = arith.constant 0.606530666 : f32
    %366 = vector.broadcast %cst_115 : f32 to vector<1x64xf32>
    %367 = arith.mulf %366, %365 : vector<1x64xf32>
    %368 = vector.extract_strided_slice %2 {offsets = [14, 0], sizes = [1, 64], strides = [1, 1]} : vector<16x64xf32> to vector<1x64xf32>
    %cst_116 = arith.constant 1.35914087 : f32
    %369 = vector.broadcast %cst_116 : f32 to vector<1x64xf32>
    %370 = arith.mulf %369, %357 : vector<1x64xf32>
    %cst_117 = arith.constant -0.679570436 : f32
    %371 = vector.broadcast %cst_117 : f32 to vector<1x64xf32>
    %372 = arith.mulf %371, %364 : vector<1x64xf32>
    %373 = arith.addf %370, %372 : vector<1x64xf32>
    %cst_118 = arith.constant 2.500000e-01 : f32
    %374 = vector.broadcast %cst_118 : f32 to vector<1x64xf32>
    %375 = arith.cmpf oge, %373, %374 : vector<1x64xf32>
    %376 = arith.extui %375 : vector<1x64xi1> to vector<1x64xi32>
    %377 = arith.sitofp %376 : vector<1x64xi32> to vector<1x64xf32>
    %cst_119 = arith.constant 1.000000e+00 : f32
    %378 = vector.broadcast %cst_119 : f32 to vector<1x64xf32>
    %379 = arith.mulf %377, %378 : vector<1x64xf32>
    %380 = arith.addf %357, %360 : vector<1x64xf32>
    %381 = arith.addf %380, %368 : vector<1x64xf32>
    %cst_120 = arith.constant 0.606530666 : f32
    %382 = vector.broadcast %cst_120 : f32 to vector<1x64xf32>
    %383 = arith.mulf %382, %381 : vector<1x64xf32>
    %384 = arith.addf %364, %367 : vector<1x64xf32>
    %385 = arith.addf %384, %377 : vector<1x64xf32>
    %cst_121 = arith.constant 0.606530666 : f32
    %386 = vector.broadcast %cst_121 : f32 to vector<1x64xf32>
    %387 = arith.mulf %386, %385 : vector<1x64xf32>
    %cst_122 = arith.constant 1.35914087 : f32
    %388 = vector.broadcast %cst_122 : f32 to vector<1x64xf32>
    %389 = arith.mulf %388, %383 : vector<1x64xf32>
    %cst_123 = arith.constant -0.679570436 : f32
    %390 = vector.broadcast %cst_123 : f32 to vector<1x64xf32>
    %391 = arith.mulf %390, %387 : vector<1x64xf32>
    %392 = arith.addf %389, %391 : vector<1x64xf32>
    %cst_124 = arith.constant 2.500000e-01 : f32
    %393 = vector.broadcast %cst_124 : f32 to vector<1x64xf32>
    %394 = arith.cmpf oge, %392, %393 : vector<1x64xf32>
    %395 = arith.extui %394 : vector<1x64xi1> to vector<1x64xi32>
    %396 = arith.sitofp %395 : vector<1x64xi32> to vector<1x64xf32>
    %cst_125 = arith.constant 1.000000e+00 : f32
    %397 = vector.broadcast %cst_125 : f32 to vector<1x64xf32>
    %398 = arith.mulf %396, %397 : vector<1x64xf32>
    %399 = tpu.concatenate %15, %41, %67, %93, %119, %145, %171, %197, %223, %249, %275, %301, %327, %353, %379, %398 in 0 : vector<1x64xf32>, vector<1x64xf32>, vector<1x64xf32>, vector<1x64xf32>, vector<1x64xf32>, vector<1x64xf32>, vector<1x64xf32>, vector<1x64xf32>, vector<1x64xf32>, vector<1x64xf32>, vector<1x64xf32>, vector<1x64xf32>, vector<1x64xf32>, vector<1x64xf32>, vector<1x64xf32>, vector<1x64xf32> -> vector<16x64xf32>
    %c0_126 = arith.constant 0 : index
    %c0_127 = arith.constant 0 : index
    %400 = vector.load %arg2[%c0_126, %c0_127] : memref<64x32xf32, #tpu.memory_space<vmem>>, vector<64x32xf32>
    %cst_128 = arith.constant dense<0.000000e+00> : vector<16x32xf32>
    %401 = tpu.matmul %399, %400, %cst_128 {dimension_numbers = #tpu.dot_dimension_numbers<[1], [0], [0], [1], [0, 0, 1, 1], [], []>} : vector<16x64xf32>, vector<64x32xf32>, vector<16x32xf32> -> vector<16x32xf32>
    %cst_129 = arith.constant 0.000000e+00 : f32
    %402 = vector.broadcast %cst_129 : f32 to vector<1x32xf32>
    %403 = vector.extract_strided_slice %401 {offsets = [0, 0], sizes = [1, 32], strides = [1, 1]} : vector<16x32xf32> to vector<1x32xf32>
    %cst_130 = arith.constant 1.35914087 : f32
    %404 = vector.broadcast %cst_130 : f32 to vector<1x32xf32>
    %405 = arith.mulf %404, %402 : vector<1x32xf32>
    %cst_131 = arith.constant -0.679570436 : f32
    %406 = vector.broadcast %cst_131 : f32 to vector<1x32xf32>
    %407 = arith.mulf %406, %402 : vector<1x32xf32>
    %408 = arith.addf %405, %407 : vector<1x32xf32>
    %cst_132 = arith.constant 2.500000e-01 : f32
    %409 = vector.broadcast %cst_132 : f32 to vector<1x32xf32>
    %410 = arith.cmpf oge, %408, %409 : vector<1x32xf32>
    %411 = arith.extui %410 : vector<1x32xi1> to vector<1x32xi32>
    %412 = arith.sitofp %411 : vector<1x32xi32> to vector<1x32xf32>
    %cst_133 = arith.constant 1.000000e+00 : f32
    %413 = vector.broadcast %cst_133 : f32 to vector<1x32xf32>
    %414 = arith.mulf %412, %413 : vector<1x32xf32>
    %415 = arith.addf %402, %402 : vector<1x32xf32>
    %416 = arith.addf %415, %403 : vector<1x32xf32>
    %cst_134 = arith.constant 0.606530666 : f32
    %417 = vector.broadcast %cst_134 : f32 to vector<1x32xf32>
    %418 = arith.mulf %417, %416 : vector<1x32xf32>
    %419 = arith.addf %402, %403 : vector<1x32xf32>
    %cst_135 = arith.constant 0.606530666 : f32
    %420 = vector.broadcast %cst_135 : f32 to vector<1x32xf32>
    %421 = arith.mulf %420, %419 : vector<1x32xf32>
    %422 = arith.addf %402, %402 : vector<1x32xf32>
    %423 = arith.addf %422, %412 : vector<1x32xf32>
    %cst_136 = arith.constant 0.606530666 : f32
    %424 = vector.broadcast %cst_136 : f32 to vector<1x32xf32>
    %425 = arith.mulf %424, %423 : vector<1x32xf32>
    %426 = arith.addf %402, %412 : vector<1x32xf32>
    %cst_137 = arith.constant 0.606530666 : f32
    %427 = vector.broadcast %cst_137 : f32 to vector<1x32xf32>
    %428 = arith.mulf %427, %426 : vector<1x32xf32>
    %429 = vector.extract_strided_slice %401 {offsets = [1, 0], sizes = [1, 32], strides = [1, 1]} : vector<16x32xf32> to vector<1x32xf32>
    %cst_138 = arith.constant 1.35914087 : f32
    %430 = vector.broadcast %cst_138 : f32 to vector<1x32xf32>
    %431 = arith.mulf %430, %418 : vector<1x32xf32>
    %cst_139 = arith.constant -0.679570436 : f32
    %432 = vector.broadcast %cst_139 : f32 to vector<1x32xf32>
    %433 = arith.mulf %432, %425 : vector<1x32xf32>
    %434 = arith.addf %431, %433 : vector<1x32xf32>
    %cst_140 = arith.constant 2.500000e-01 : f32
    %435 = vector.broadcast %cst_140 : f32 to vector<1x32xf32>
    %436 = arith.cmpf oge, %434, %435 : vector<1x32xf32>
    %437 = arith.extui %436 : vector<1x32xi1> to vector<1x32xi32>
    %438 = arith.sitofp %437 : vector<1x32xi32> to vector<1x32xf32>
    %cst_141 = arith.constant 1.000000e+00 : f32
    %439 = vector.broadcast %cst_141 : f32 to vector<1x32xf32>
    %440 = arith.mulf %438, %439 : vector<1x32xf32>
    %441 = arith.addf %418, %421 : vector<1x32xf32>
    %442 = arith.addf %441, %429 : vector<1x32xf32>
    %cst_142 = arith.constant 0.606530666 : f32
    %443 = vector.broadcast %cst_142 : f32 to vector<1x32xf32>
    %444 = arith.mulf %443, %442 : vector<1x32xf32>
    %445 = arith.addf %421, %429 : vector<1x32xf32>
    %cst_143 = arith.constant 0.606530666 : f32
    %446 = vector.broadcast %cst_143 : f32 to vector<1x32xf32>
    %447 = arith.mulf %446, %445 : vector<1x32xf32>
    %448 = arith.addf %425, %428 : vector<1x32xf32>
    %449 = arith.addf %448, %438 : vector<1x32xf32>
    %cst_144 = arith.constant 0.606530666 : f32
    %450 = vector.broadcast %cst_144 : f32 to vector<1x32xf32>
    %451 = arith.mulf %450, %449 : vector<1x32xf32>
    %452 = arith.addf %428, %438 : vector<1x32xf32>
    %cst_145 = arith.constant 0.606530666 : f32
    %453 = vector.broadcast %cst_145 : f32 to vector<1x32xf32>
    %454 = arith.mulf %453, %452 : vector<1x32xf32>
    %455 = vector.extract_strided_slice %401 {offsets = [2, 0], sizes = [1, 32], strides = [1, 1]} : vector<16x32xf32> to vector<1x32xf32>
    %cst_146 = arith.constant 1.35914087 : f32
    %456 = vector.broadcast %cst_146 : f32 to vector<1x32xf32>
    %457 = arith.mulf %456, %444 : vector<1x32xf32>
    %cst_147 = arith.constant -0.679570436 : f32
    %458 = vector.broadcast %cst_147 : f32 to vector<1x32xf32>
    %459 = arith.mulf %458, %451 : vector<1x32xf32>
    %460 = arith.addf %457, %459 : vector<1x32xf32>
    %cst_148 = arith.constant 2.500000e-01 : f32
    %461 = vector.broadcast %cst_148 : f32 to vector<1x32xf32>
    %462 = arith.cmpf oge, %460, %461 : vector<1x32xf32>
    %463 = arith.extui %462 : vector<1x32xi1> to vector<1x32xi32>
    %464 = arith.sitofp %463 : vector<1x32xi32> to vector<1x32xf32>
    %cst_149 = arith.constant 1.000000e+00 : f32
    %465 = vector.broadcast %cst_149 : f32 to vector<1x32xf32>
    %466 = arith.mulf %464, %465 : vector<1x32xf32>
    %467 = arith.addf %444, %447 : vector<1x32xf32>
    %468 = arith.addf %467, %455 : vector<1x32xf32>
    %cst_150 = arith.constant 0.606530666 : f32
    %469 = vector.broadcast %cst_150 : f32 to vector<1x32xf32>
    %470 = arith.mulf %469, %468 : vector<1x32xf32>
    %471 = arith.addf %447, %455 : vector<1x32xf32>
    %cst_151 = arith.constant 0.606530666 : f32
    %472 = vector.broadcast %cst_151 : f32 to vector<1x32xf32>
    %473 = arith.mulf %472, %471 : vector<1x32xf32>
    %474 = arith.addf %451, %454 : vector<1x32xf32>
    %475 = arith.addf %474, %464 : vector<1x32xf32>
    %cst_152 = arith.constant 0.606530666 : f32
    %476 = vector.broadcast %cst_152 : f32 to vector<1x32xf32>
    %477 = arith.mulf %476, %475 : vector<1x32xf32>
    %478 = arith.addf %454, %464 : vector<1x32xf32>
    %cst_153 = arith.constant 0.606530666 : f32
    %479 = vector.broadcast %cst_153 : f32 to vector<1x32xf32>
    %480 = arith.mulf %479, %478 : vector<1x32xf32>
    %481 = vector.extract_strided_slice %401 {offsets = [3, 0], sizes = [1, 32], strides = [1, 1]} : vector<16x32xf32> to vector<1x32xf32>
    %cst_154 = arith.constant 1.35914087 : f32
    %482 = vector.broadcast %cst_154 : f32 to vector<1x32xf32>
    %483 = arith.mulf %482, %470 : vector<1x32xf32>
    %cst_155 = arith.constant -0.679570436 : f32
    %484 = vector.broadcast %cst_155 : f32 to vector<1x32xf32>
    %485 = arith.mulf %484, %477 : vector<1x32xf32>
    %486 = arith.addf %483, %485 : vector<1x32xf32>
    %cst_156 = arith.constant 2.500000e-01 : f32
    %487 = vector.broadcast %cst_156 : f32 to vector<1x32xf32>
    %488 = arith.cmpf oge, %486, %487 : vector<1x32xf32>
    %489 = arith.extui %488 : vector<1x32xi1> to vector<1x32xi32>
    %490 = arith.sitofp %489 : vector<1x32xi32> to vector<1x32xf32>
    %cst_157 = arith.constant 1.000000e+00 : f32
    %491 = vector.broadcast %cst_157 : f32 to vector<1x32xf32>
    %492 = arith.mulf %490, %491 : vector<1x32xf32>
    %493 = arith.addf %470, %473 : vector<1x32xf32>
    %494 = arith.addf %493, %481 : vector<1x32xf32>
    %cst_158 = arith.constant 0.606530666 : f32
    %495 = vector.broadcast %cst_158 : f32 to vector<1x32xf32>
    %496 = arith.mulf %495, %494 : vector<1x32xf32>
    %497 = arith.addf %473, %481 : vector<1x32xf32>
    %cst_159 = arith.constant 0.606530666 : f32
    %498 = vector.broadcast %cst_159 : f32 to vector<1x32xf32>
    %499 = arith.mulf %498, %497 : vector<1x32xf32>
    %500 = arith.addf %477, %480 : vector<1x32xf32>
    %501 = arith.addf %500, %490 : vector<1x32xf32>
    %cst_160 = arith.constant 0.606530666 : f32
    %502 = vector.broadcast %cst_160 : f32 to vector<1x32xf32>
    %503 = arith.mulf %502, %501 : vector<1x32xf32>
    %504 = arith.addf %480, %490 : vector<1x32xf32>
    %cst_161 = arith.constant 0.606530666 : f32
    %505 = vector.broadcast %cst_161 : f32 to vector<1x32xf32>
    %506 = arith.mulf %505, %504 : vector<1x32xf32>
    %507 = vector.extract_strided_slice %401 {offsets = [4, 0], sizes = [1, 32], strides = [1, 1]} : vector<16x32xf32> to vector<1x32xf32>
    %cst_162 = arith.constant 1.35914087 : f32
    %508 = vector.broadcast %cst_162 : f32 to vector<1x32xf32>
    %509 = arith.mulf %508, %496 : vector<1x32xf32>
    %cst_163 = arith.constant -0.679570436 : f32
    %510 = vector.broadcast %cst_163 : f32 to vector<1x32xf32>
    %511 = arith.mulf %510, %503 : vector<1x32xf32>
    %512 = arith.addf %509, %511 : vector<1x32xf32>
    %cst_164 = arith.constant 2.500000e-01 : f32
    %513 = vector.broadcast %cst_164 : f32 to vector<1x32xf32>
    %514 = arith.cmpf oge, %512, %513 : vector<1x32xf32>
    %515 = arith.extui %514 : vector<1x32xi1> to vector<1x32xi32>
    %516 = arith.sitofp %515 : vector<1x32xi32> to vector<1x32xf32>
    %cst_165 = arith.constant 1.000000e+00 : f32
    %517 = vector.broadcast %cst_165 : f32 to vector<1x32xf32>
    %518 = arith.mulf %516, %517 : vector<1x32xf32>
    %519 = arith.addf %496, %499 : vector<1x32xf32>
    %520 = arith.addf %519, %507 : vector<1x32xf32>
    %cst_166 = arith.constant 0.606530666 : f32
    %521 = vector.broadcast %cst_166 : f32 to vector<1x32xf32>
    %522 = arith.mulf %521, %520 : vector<1x32xf32>
    %523 = arith.addf %499, %507 : vector<1x32xf32>
    %cst_167 = arith.constant 0.606530666 : f32
    %524 = vector.broadcast %cst_167 : f32 to vector<1x32xf32>
    %525 = arith.mulf %524, %523 : vector<1x32xf32>
    %526 = arith.addf %503, %506 : vector<1x32xf32>
    %527 = arith.addf %526, %516 : vector<1x32xf32>
    %cst_168 = arith.constant 0.606530666 : f32
    %528 = vector.broadcast %cst_168 : f32 to vector<1x32xf32>
    %529 = arith.mulf %528, %527 : vector<1x32xf32>
    %530 = arith.addf %506, %516 : vector<1x32xf32>
    %cst_169 = arith.constant 0.606530666 : f32
    %531 = vector.broadcast %cst_169 : f32 to vector<1x32xf32>
    %532 = arith.mulf %531, %530 : vector<1x32xf32>
    %533 = vector.extract_strided_slice %401 {offsets = [5, 0], sizes = [1, 32], strides = [1, 1]} : vector<16x32xf32> to vector<1x32xf32>
    %cst_170 = arith.constant 1.35914087 : f32
    %534 = vector.broadcast %cst_170 : f32 to vector<1x32xf32>
    %535 = arith.mulf %534, %522 : vector<1x32xf32>
    %cst_171 = arith.constant -0.679570436 : f32
    %536 = vector.broadcast %cst_171 : f32 to vector<1x32xf32>
    %537 = arith.mulf %536, %529 : vector<1x32xf32>
    %538 = arith.addf %535, %537 : vector<1x32xf32>
    %cst_172 = arith.constant 2.500000e-01 : f32
    %539 = vector.broadcast %cst_172 : f32 to vector<1x32xf32>
    %540 = arith.cmpf oge, %538, %539 : vector<1x32xf32>
    %541 = arith.extui %540 : vector<1x32xi1> to vector<1x32xi32>
    %542 = arith.sitofp %541 : vector<1x32xi32> to vector<1x32xf32>
    %cst_173 = arith.constant 1.000000e+00 : f32
    %543 = vector.broadcast %cst_173 : f32 to vector<1x32xf32>
    %544 = arith.mulf %542, %543 : vector<1x32xf32>
    %545 = arith.addf %522, %525 : vector<1x32xf32>
    %546 = arith.addf %545, %533 : vector<1x32xf32>
    %cst_174 = arith.constant 0.606530666 : f32
    %547 = vector.broadcast %cst_174 : f32 to vector<1x32xf32>
    %548 = arith.mulf %547, %546 : vector<1x32xf32>
    %549 = arith.addf %525, %533 : vector<1x32xf32>
    %cst_175 = arith.constant 0.606530666 : f32
    %550 = vector.broadcast %cst_175 : f32 to vector<1x32xf32>
    %551 = arith.mulf %550, %549 : vector<1x32xf32>
    %552 = arith.addf %529, %532 : vector<1x32xf32>
    %553 = arith.addf %552, %542 : vector<1x32xf32>
    %cst_176 = arith.constant 0.606530666 : f32
    %554 = vector.broadcast %cst_176 : f32 to vector<1x32xf32>
    %555 = arith.mulf %554, %553 : vector<1x32xf32>
    %556 = arith.addf %532, %542 : vector<1x32xf32>
    %cst_177 = arith.constant 0.606530666 : f32
    %557 = vector.broadcast %cst_177 : f32 to vector<1x32xf32>
    %558 = arith.mulf %557, %556 : vector<1x32xf32>
    %559 = vector.extract_strided_slice %401 {offsets = [6, 0], sizes = [1, 32], strides = [1, 1]} : vector<16x32xf32> to vector<1x32xf32>
    %cst_178 = arith.constant 1.35914087 : f32
    %560 = vector.broadcast %cst_178 : f32 to vector<1x32xf32>
    %561 = arith.mulf %560, %548 : vector<1x32xf32>
    %cst_179 = arith.constant -0.679570436 : f32
    %562 = vector.broadcast %cst_179 : f32 to vector<1x32xf32>
    %563 = arith.mulf %562, %555 : vector<1x32xf32>
    %564 = arith.addf %561, %563 : vector<1x32xf32>
    %cst_180 = arith.constant 2.500000e-01 : f32
    %565 = vector.broadcast %cst_180 : f32 to vector<1x32xf32>
    %566 = arith.cmpf oge, %564, %565 : vector<1x32xf32>
    %567 = arith.extui %566 : vector<1x32xi1> to vector<1x32xi32>
    %568 = arith.sitofp %567 : vector<1x32xi32> to vector<1x32xf32>
    %cst_181 = arith.constant 1.000000e+00 : f32
    %569 = vector.broadcast %cst_181 : f32 to vector<1x32xf32>
    %570 = arith.mulf %568, %569 : vector<1x32xf32>
    %571 = arith.addf %548, %551 : vector<1x32xf32>
    %572 = arith.addf %571, %559 : vector<1x32xf32>
    %cst_182 = arith.constant 0.606530666 : f32
    %573 = vector.broadcast %cst_182 : f32 to vector<1x32xf32>
    %574 = arith.mulf %573, %572 : vector<1x32xf32>
    %575 = arith.addf %551, %559 : vector<1x32xf32>
    %cst_183 = arith.constant 0.606530666 : f32
    %576 = vector.broadcast %cst_183 : f32 to vector<1x32xf32>
    %577 = arith.mulf %576, %575 : vector<1x32xf32>
    %578 = arith.addf %555, %558 : vector<1x32xf32>
    %579 = arith.addf %578, %568 : vector<1x32xf32>
    %cst_184 = arith.constant 0.606530666 : f32
    %580 = vector.broadcast %cst_184 : f32 to vector<1x32xf32>
    %581 = arith.mulf %580, %579 : vector<1x32xf32>
    %582 = arith.addf %558, %568 : vector<1x32xf32>
    %cst_185 = arith.constant 0.606530666 : f32
    %583 = vector.broadcast %cst_185 : f32 to vector<1x32xf32>
    %584 = arith.mulf %583, %582 : vector<1x32xf32>
    %585 = vector.extract_strided_slice %401 {offsets = [7, 0], sizes = [1, 32], strides = [1, 1]} : vector<16x32xf32> to vector<1x32xf32>
    %cst_186 = arith.constant 1.35914087 : f32
    %586 = vector.broadcast %cst_186 : f32 to vector<1x32xf32>
    %587 = arith.mulf %586, %574 : vector<1x32xf32>
    %cst_187 = arith.constant -0.679570436 : f32
    %588 = vector.broadcast %cst_187 : f32 to vector<1x32xf32>
    %589 = arith.mulf %588, %581 : vector<1x32xf32>
    %590 = arith.addf %587, %589 : vector<1x32xf32>
    %cst_188 = arith.constant 2.500000e-01 : f32
    %591 = vector.broadcast %cst_188 : f32 to vector<1x32xf32>
    %592 = arith.cmpf oge, %590, %591 : vector<1x32xf32>
    %593 = arith.extui %592 : vector<1x32xi1> to vector<1x32xi32>
    %594 = arith.sitofp %593 : vector<1x32xi32> to vector<1x32xf32>
    %cst_189 = arith.constant 1.000000e+00 : f32
    %595 = vector.broadcast %cst_189 : f32 to vector<1x32xf32>
    %596 = arith.mulf %594, %595 : vector<1x32xf32>
    %597 = arith.addf %574, %577 : vector<1x32xf32>
    %598 = arith.addf %597, %585 : vector<1x32xf32>
    %cst_190 = arith.constant 0.606530666 : f32
    %599 = vector.broadcast %cst_190 : f32 to vector<1x32xf32>
    %600 = arith.mulf %599, %598 : vector<1x32xf32>
    %601 = arith.addf %577, %585 : vector<1x32xf32>
    %cst_191 = arith.constant 0.606530666 : f32
    %602 = vector.broadcast %cst_191 : f32 to vector<1x32xf32>
    %603 = arith.mulf %602, %601 : vector<1x32xf32>
    %604 = arith.addf %581, %584 : vector<1x32xf32>
    %605 = arith.addf %604, %594 : vector<1x32xf32>
    %cst_192 = arith.constant 0.606530666 : f32
    %606 = vector.broadcast %cst_192 : f32 to vector<1x32xf32>
    %607 = arith.mulf %606, %605 : vector<1x32xf32>
    %608 = arith.addf %584, %594 : vector<1x32xf32>
    %cst_193 = arith.constant 0.606530666 : f32
    %609 = vector.broadcast %cst_193 : f32 to vector<1x32xf32>
    %610 = arith.mulf %609, %608 : vector<1x32xf32>
    %611 = vector.extract_strided_slice %401 {offsets = [8, 0], sizes = [1, 32], strides = [1, 1]} : vector<16x32xf32> to vector<1x32xf32>
    %cst_194 = arith.constant 1.35914087 : f32
    %612 = vector.broadcast %cst_194 : f32 to vector<1x32xf32>
    %613 = arith.mulf %612, %600 : vector<1x32xf32>
    %cst_195 = arith.constant -0.679570436 : f32
    %614 = vector.broadcast %cst_195 : f32 to vector<1x32xf32>
    %615 = arith.mulf %614, %607 : vector<1x32xf32>
    %616 = arith.addf %613, %615 : vector<1x32xf32>
    %cst_196 = arith.constant 2.500000e-01 : f32
    %617 = vector.broadcast %cst_196 : f32 to vector<1x32xf32>
    %618 = arith.cmpf oge, %616, %617 : vector<1x32xf32>
    %619 = arith.extui %618 : vector<1x32xi1> to vector<1x32xi32>
    %620 = arith.sitofp %619 : vector<1x32xi32> to vector<1x32xf32>
    %cst_197 = arith.constant 1.000000e+00 : f32
    %621 = vector.broadcast %cst_197 : f32 to vector<1x32xf32>
    %622 = arith.mulf %620, %621 : vector<1x32xf32>
    %623 = arith.addf %600, %603 : vector<1x32xf32>
    %624 = arith.addf %623, %611 : vector<1x32xf32>
    %cst_198 = arith.constant 0.606530666 : f32
    %625 = vector.broadcast %cst_198 : f32 to vector<1x32xf32>
    %626 = arith.mulf %625, %624 : vector<1x32xf32>
    %627 = arith.addf %603, %611 : vector<1x32xf32>
    %cst_199 = arith.constant 0.606530666 : f32
    %628 = vector.broadcast %cst_199 : f32 to vector<1x32xf32>
    %629 = arith.mulf %628, %627 : vector<1x32xf32>
    %630 = arith.addf %607, %610 : vector<1x32xf32>
    %631 = arith.addf %630, %620 : vector<1x32xf32>
    %cst_200 = arith.constant 0.606530666 : f32
    %632 = vector.broadcast %cst_200 : f32 to vector<1x32xf32>
    %633 = arith.mulf %632, %631 : vector<1x32xf32>
    %634 = arith.addf %610, %620 : vector<1x32xf32>
    %cst_201 = arith.constant 0.606530666 : f32
    %635 = vector.broadcast %cst_201 : f32 to vector<1x32xf32>
    %636 = arith.mulf %635, %634 : vector<1x32xf32>
    %637 = vector.extract_strided_slice %401 {offsets = [9, 0], sizes = [1, 32], strides = [1, 1]} : vector<16x32xf32> to vector<1x32xf32>
    %cst_202 = arith.constant 1.35914087 : f32
    %638 = vector.broadcast %cst_202 : f32 to vector<1x32xf32>
    %639 = arith.mulf %638, %626 : vector<1x32xf32>
    %cst_203 = arith.constant -0.679570436 : f32
    %640 = vector.broadcast %cst_203 : f32 to vector<1x32xf32>
    %641 = arith.mulf %640, %633 : vector<1x32xf32>
    %642 = arith.addf %639, %641 : vector<1x32xf32>
    %cst_204 = arith.constant 2.500000e-01 : f32
    %643 = vector.broadcast %cst_204 : f32 to vector<1x32xf32>
    %644 = arith.cmpf oge, %642, %643 : vector<1x32xf32>
    %645 = arith.extui %644 : vector<1x32xi1> to vector<1x32xi32>
    %646 = arith.sitofp %645 : vector<1x32xi32> to vector<1x32xf32>
    %cst_205 = arith.constant 1.000000e+00 : f32
    %647 = vector.broadcast %cst_205 : f32 to vector<1x32xf32>
    %648 = arith.mulf %646, %647 : vector<1x32xf32>
    %649 = arith.addf %626, %629 : vector<1x32xf32>
    %650 = arith.addf %649, %637 : vector<1x32xf32>
    %cst_206 = arith.constant 0.606530666 : f32
    %651 = vector.broadcast %cst_206 : f32 to vector<1x32xf32>
    %652 = arith.mulf %651, %650 : vector<1x32xf32>
    %653 = arith.addf %629, %637 : vector<1x32xf32>
    %cst_207 = arith.constant 0.606530666 : f32
    %654 = vector.broadcast %cst_207 : f32 to vector<1x32xf32>
    %655 = arith.mulf %654, %653 : vector<1x32xf32>
    %656 = arith.addf %633, %636 : vector<1x32xf32>
    %657 = arith.addf %656, %646 : vector<1x32xf32>
    %cst_208 = arith.constant 0.606530666 : f32
    %658 = vector.broadcast %cst_208 : f32 to vector<1x32xf32>
    %659 = arith.mulf %658, %657 : vector<1x32xf32>
    %660 = arith.addf %636, %646 : vector<1x32xf32>
    %cst_209 = arith.constant 0.606530666 : f32
    %661 = vector.broadcast %cst_209 : f32 to vector<1x32xf32>
    %662 = arith.mulf %661, %660 : vector<1x32xf32>
    %663 = vector.extract_strided_slice %401 {offsets = [10, 0], sizes = [1, 32], strides = [1, 1]} : vector<16x32xf32> to vector<1x32xf32>
    %cst_210 = arith.constant 1.35914087 : f32
    %664 = vector.broadcast %cst_210 : f32 to vector<1x32xf32>
    %665 = arith.mulf %664, %652 : vector<1x32xf32>
    %cst_211 = arith.constant -0.679570436 : f32
    %666 = vector.broadcast %cst_211 : f32 to vector<1x32xf32>
    %667 = arith.mulf %666, %659 : vector<1x32xf32>
    %668 = arith.addf %665, %667 : vector<1x32xf32>
    %cst_212 = arith.constant 2.500000e-01 : f32
    %669 = vector.broadcast %cst_212 : f32 to vector<1x32xf32>
    %670 = arith.cmpf oge, %668, %669 : vector<1x32xf32>
    %671 = arith.extui %670 : vector<1x32xi1> to vector<1x32xi32>
    %672 = arith.sitofp %671 : vector<1x32xi32> to vector<1x32xf32>
    %cst_213 = arith.constant 1.000000e+00 : f32
    %673 = vector.broadcast %cst_213 : f32 to vector<1x32xf32>
    %674 = arith.mulf %672, %673 : vector<1x32xf32>
    %675 = arith.addf %652, %655 : vector<1x32xf32>
    %676 = arith.addf %675, %663 : vector<1x32xf32>
    %cst_214 = arith.constant 0.606530666 : f32
    %677 = vector.broadcast %cst_214 : f32 to vector<1x32xf32>
    %678 = arith.mulf %677, %676 : vector<1x32xf32>
    %679 = arith.addf %655, %663 : vector<1x32xf32>
    %cst_215 = arith.constant 0.606530666 : f32
    %680 = vector.broadcast %cst_215 : f32 to vector<1x32xf32>
    %681 = arith.mulf %680, %679 : vector<1x32xf32>
    %682 = arith.addf %659, %662 : vector<1x32xf32>
    %683 = arith.addf %682, %672 : vector<1x32xf32>
    %cst_216 = arith.constant 0.606530666 : f32
    %684 = vector.broadcast %cst_216 : f32 to vector<1x32xf32>
    %685 = arith.mulf %684, %683 : vector<1x32xf32>
    %686 = arith.addf %662, %672 : vector<1x32xf32>
    %cst_217 = arith.constant 0.606530666 : f32
    %687 = vector.broadcast %cst_217 : f32 to vector<1x32xf32>
    %688 = arith.mulf %687, %686 : vector<1x32xf32>
    %689 = vector.extract_strided_slice %401 {offsets = [11, 0], sizes = [1, 32], strides = [1, 1]} : vector<16x32xf32> to vector<1x32xf32>
    %cst_218 = arith.constant 1.35914087 : f32
    %690 = vector.broadcast %cst_218 : f32 to vector<1x32xf32>
    %691 = arith.mulf %690, %678 : vector<1x32xf32>
    %cst_219 = arith.constant -0.679570436 : f32
    %692 = vector.broadcast %cst_219 : f32 to vector<1x32xf32>
    %693 = arith.mulf %692, %685 : vector<1x32xf32>
    %694 = arith.addf %691, %693 : vector<1x32xf32>
    %cst_220 = arith.constant 2.500000e-01 : f32
    %695 = vector.broadcast %cst_220 : f32 to vector<1x32xf32>
    %696 = arith.cmpf oge, %694, %695 : vector<1x32xf32>
    %697 = arith.extui %696 : vector<1x32xi1> to vector<1x32xi32>
    %698 = arith.sitofp %697 : vector<1x32xi32> to vector<1x32xf32>
    %cst_221 = arith.constant 1.000000e+00 : f32
    %699 = vector.broadcast %cst_221 : f32 to vector<1x32xf32>
    %700 = arith.mulf %698, %699 : vector<1x32xf32>
    %701 = arith.addf %678, %681 : vector<1x32xf32>
    %702 = arith.addf %701, %689 : vector<1x32xf32>
    %cst_222 = arith.constant 0.606530666 : f32
    %703 = vector.broadcast %cst_222 : f32 to vector<1x32xf32>
    %704 = arith.mulf %703, %702 : vector<1x32xf32>
    %705 = arith.addf %681, %689 : vector<1x32xf32>
    %cst_223 = arith.constant 0.606530666 : f32
    %706 = vector.broadcast %cst_223 : f32 to vector<1x32xf32>
    %707 = arith.mulf %706, %705 : vector<1x32xf32>
    %708 = arith.addf %685, %688 : vector<1x32xf32>
    %709 = arith.addf %708, %698 : vector<1x32xf32>
    %cst_224 = arith.constant 0.606530666 : f32
    %710 = vector.broadcast %cst_224 : f32 to vector<1x32xf32>
    %711 = arith.mulf %710, %709 : vector<1x32xf32>
    %712 = arith.addf %688, %698 : vector<1x32xf32>
    %cst_225 = arith.constant 0.606530666 : f32
    %713 = vector.broadcast %cst_225 : f32 to vector<1x32xf32>
    %714 = arith.mulf %713, %712 : vector<1x32xf32>
    %715 = vector.extract_strided_slice %401 {offsets = [12, 0], sizes = [1, 32], strides = [1, 1]} : vector<16x32xf32> to vector<1x32xf32>
    %cst_226 = arith.constant 1.35914087 : f32
    %716 = vector.broadcast %cst_226 : f32 to vector<1x32xf32>
    %717 = arith.mulf %716, %704 : vector<1x32xf32>
    %cst_227 = arith.constant -0.679570436 : f32
    %718 = vector.broadcast %cst_227 : f32 to vector<1x32xf32>
    %719 = arith.mulf %718, %711 : vector<1x32xf32>
    %720 = arith.addf %717, %719 : vector<1x32xf32>
    %cst_228 = arith.constant 2.500000e-01 : f32
    %721 = vector.broadcast %cst_228 : f32 to vector<1x32xf32>
    %722 = arith.cmpf oge, %720, %721 : vector<1x32xf32>
    %723 = arith.extui %722 : vector<1x32xi1> to vector<1x32xi32>
    %724 = arith.sitofp %723 : vector<1x32xi32> to vector<1x32xf32>
    %cst_229 = arith.constant 1.000000e+00 : f32
    %725 = vector.broadcast %cst_229 : f32 to vector<1x32xf32>
    %726 = arith.mulf %724, %725 : vector<1x32xf32>
    %727 = arith.addf %704, %707 : vector<1x32xf32>
    %728 = arith.addf %727, %715 : vector<1x32xf32>
    %cst_230 = arith.constant 0.606530666 : f32
    %729 = vector.broadcast %cst_230 : f32 to vector<1x32xf32>
    %730 = arith.mulf %729, %728 : vector<1x32xf32>
    %731 = arith.addf %707, %715 : vector<1x32xf32>
    %cst_231 = arith.constant 0.606530666 : f32
    %732 = vector.broadcast %cst_231 : f32 to vector<1x32xf32>
    %733 = arith.mulf %732, %731 : vector<1x32xf32>
    %734 = arith.addf %711, %714 : vector<1x32xf32>
    %735 = arith.addf %734, %724 : vector<1x32xf32>
    %cst_232 = arith.constant 0.606530666 : f32
    %736 = vector.broadcast %cst_232 : f32 to vector<1x32xf32>
    %737 = arith.mulf %736, %735 : vector<1x32xf32>
    %738 = arith.addf %714, %724 : vector<1x32xf32>
    %cst_233 = arith.constant 0.606530666 : f32
    %739 = vector.broadcast %cst_233 : f32 to vector<1x32xf32>
    %740 = arith.mulf %739, %738 : vector<1x32xf32>
    %741 = vector.extract_strided_slice %401 {offsets = [13, 0], sizes = [1, 32], strides = [1, 1]} : vector<16x32xf32> to vector<1x32xf32>
    %cst_234 = arith.constant 1.35914087 : f32
    %742 = vector.broadcast %cst_234 : f32 to vector<1x32xf32>
    %743 = arith.mulf %742, %730 : vector<1x32xf32>
    %cst_235 = arith.constant -0.679570436 : f32
    %744 = vector.broadcast %cst_235 : f32 to vector<1x32xf32>
    %745 = arith.mulf %744, %737 : vector<1x32xf32>
    %746 = arith.addf %743, %745 : vector<1x32xf32>
    %cst_236 = arith.constant 2.500000e-01 : f32
    %747 = vector.broadcast %cst_236 : f32 to vector<1x32xf32>
    %748 = arith.cmpf oge, %746, %747 : vector<1x32xf32>
    %749 = arith.extui %748 : vector<1x32xi1> to vector<1x32xi32>
    %750 = arith.sitofp %749 : vector<1x32xi32> to vector<1x32xf32>
    %cst_237 = arith.constant 1.000000e+00 : f32
    %751 = vector.broadcast %cst_237 : f32 to vector<1x32xf32>
    %752 = arith.mulf %750, %751 : vector<1x32xf32>
    %753 = arith.addf %730, %733 : vector<1x32xf32>
    %754 = arith.addf %753, %741 : vector<1x32xf32>
    %cst_238 = arith.constant 0.606530666 : f32
    %755 = vector.broadcast %cst_238 : f32 to vector<1x32xf32>
    %756 = arith.mulf %755, %754 : vector<1x32xf32>
    %757 = arith.addf %733, %741 : vector<1x32xf32>
    %cst_239 = arith.constant 0.606530666 : f32
    %758 = vector.broadcast %cst_239 : f32 to vector<1x32xf32>
    %759 = arith.mulf %758, %757 : vector<1x32xf32>
    %760 = arith.addf %737, %740 : vector<1x32xf32>
    %761 = arith.addf %760, %750 : vector<1x32xf32>
    %cst_240 = arith.constant 0.606530666 : f32
    %762 = vector.broadcast %cst_240 : f32 to vector<1x32xf32>
    %763 = arith.mulf %762, %761 : vector<1x32xf32>
    %764 = arith.addf %740, %750 : vector<1x32xf32>
    %cst_241 = arith.constant 0.606530666 : f32
    %765 = vector.broadcast %cst_241 : f32 to vector<1x32xf32>
    %766 = arith.mulf %765, %764 : vector<1x32xf32>
    %767 = vector.extract_strided_slice %401 {offsets = [14, 0], sizes = [1, 32], strides = [1, 1]} : vector<16x32xf32> to vector<1x32xf32>
    %cst_242 = arith.constant 1.35914087 : f32
    %768 = vector.broadcast %cst_242 : f32 to vector<1x32xf32>
    %769 = arith.mulf %768, %756 : vector<1x32xf32>
    %cst_243 = arith.constant -0.679570436 : f32
    %770 = vector.broadcast %cst_243 : f32 to vector<1x32xf32>
    %771 = arith.mulf %770, %763 : vector<1x32xf32>
    %772 = arith.addf %769, %771 : vector<1x32xf32>
    %cst_244 = arith.constant 2.500000e-01 : f32
    %773 = vector.broadcast %cst_244 : f32 to vector<1x32xf32>
    %774 = arith.cmpf oge, %772, %773 : vector<1x32xf32>
    %775 = arith.extui %774 : vector<1x32xi1> to vector<1x32xi32>
    %776 = arith.sitofp %775 : vector<1x32xi32> to vector<1x32xf32>
    %cst_245 = arith.constant 1.000000e+00 : f32
    %777 = vector.broadcast %cst_245 : f32 to vector<1x32xf32>
    %778 = arith.mulf %776, %777 : vector<1x32xf32>
    %779 = arith.addf %756, %759 : vector<1x32xf32>
    %780 = arith.addf %779, %767 : vector<1x32xf32>
    %cst_246 = arith.constant 0.606530666 : f32
    %781 = vector.broadcast %cst_246 : f32 to vector<1x32xf32>
    %782 = arith.mulf %781, %780 : vector<1x32xf32>
    %783 = arith.addf %763, %766 : vector<1x32xf32>
    %784 = arith.addf %783, %776 : vector<1x32xf32>
    %cst_247 = arith.constant 0.606530666 : f32
    %785 = vector.broadcast %cst_247 : f32 to vector<1x32xf32>
    %786 = arith.mulf %785, %784 : vector<1x32xf32>
    %cst_248 = arith.constant 1.35914087 : f32
    %787 = vector.broadcast %cst_248 : f32 to vector<1x32xf32>
    %788 = arith.mulf %787, %782 : vector<1x32xf32>
    %cst_249 = arith.constant -0.679570436 : f32
    %789 = vector.broadcast %cst_249 : f32 to vector<1x32xf32>
    %790 = arith.mulf %789, %786 : vector<1x32xf32>
    %791 = arith.addf %788, %790 : vector<1x32xf32>
    %cst_250 = arith.constant 2.500000e-01 : f32
    %792 = vector.broadcast %cst_250 : f32 to vector<1x32xf32>
    %793 = arith.cmpf oge, %791, %792 : vector<1x32xf32>
    %794 = arith.extui %793 : vector<1x32xi1> to vector<1x32xi32>
    %795 = arith.sitofp %794 : vector<1x32xi32> to vector<1x32xf32>
    %cst_251 = arith.constant 1.000000e+00 : f32
    %796 = vector.broadcast %cst_251 : f32 to vector<1x32xf32>
    %797 = arith.mulf %795, %796 : vector<1x32xf32>
    %798 = tpu.concatenate %414, %440, %466, %492, %518, %544, %570, %596, %622, %648, %674, %700, %726, %752, %778, %797 in 0 : vector<1x32xf32>, vector<1x32xf32>, vector<1x32xf32>, vector<1x32xf32>, vector<1x32xf32>, vector<1x32xf32>, vector<1x32xf32>, vector<1x32xf32>, vector<1x32xf32>, vector<1x32xf32>, vector<1x32xf32>, vector<1x32xf32>, vector<1x32xf32>, vector<1x32xf32>, vector<1x32xf32>, vector<1x32xf32> -> vector<16x32xf32>
    %c0_252 = arith.constant 0 : index
    %c0_253 = arith.constant 0 : index
    %799 = vector.load %arg3[%c0_252, %c0_253] : memref<16x32xf32, #tpu.memory_space<vmem>>, vector<16x32xf32>
    tpu.vector_store %arg3[%c0_252, %c0_253], %798 {strides = array<i32>} : memref<16x32xf32, #tpu.memory_space<vmem>>, vector<16x32xf32>,
    return
  }
}

</mosaic_0001>

<llo_original>
// kernel: tpu_custom_call.1
$region0: #{tpu_custom_call.1}
  #allocation0 [shape = 'u32[]', space=smem, size = 0x4, offset = 0x4, fixed_abs, tag = 'smem constant byte address 0x4 - core index']
  #allocation1 [shape = 'u32[144,128]{1,0:T(1,128)}', space=vmem, size = 0x12000, scoped, tag = 'internal scratch']
  %s0 = inlined_call_operand.vmem [shape: f32[16,128], index: 0, kind: input, shape index: {}]
  %s1 = inlined_call_operand.vmem [shape: f32[128,64], index: 1, kind: input, shape index: {}]
  %s2 = inlined_call_operand.vmem [shape: f32[64,32], index: 2, kind: input, shape index: {}]
  %s3 = inlined_call_operand.hbm [shape: f32[16,32], index: 3, kind: output, shape index: {}]
  %s4 = sld [smem:[#allocation0]]
  $region22: #{tpu_custom_call.1} parent=0
    _
  %s6 = ssub.s32 1, %s4
  %s7 = scalar_select 0, %s6, %s4
  $region1: #{tpu_custom_call.1} parent=0
    #allocation2 [shape = 'u8[8192]{0}', space=vmem, size = 0x2000, scoped, tag = 'output window, operand 0, single buffered']
    #allocation3 [shape = 's32[1]{0}', space=sflag, size = 0x4, scoped, tag = 'scoped memory for tpu_custom_call.1']
    %8 = vsyncpa [#allocation3], 0
    // Predicated region
    $region2: #{tpu_custom_call.1} parent=1 // pred_check
      _
    $region3: #{tpu_custom_call.1} parent=1 // pred_check_branch
      %10 = sbr.rel (0) target = $region5
    $region4: #{tpu_custom_call.1} parent=1 // pred_region
      _
    $region5: #{tpu_custom_call.1} parent=1 // pred_fallthru
      _
    // Predicated region
    $region6: #{tpu_custom_call.1} parent=1 // pred_check
      _
    $region7: #{tpu_custom_call.1} parent=1 // pred_check_branch
      %12 = sbr.rel (0) target = $region9
    $region8: #{tpu_custom_call.1} parent=1 // pred_region
      _
    $region9: #{tpu_custom_call.1} parent=1 // pred_fallthru
      _
    // Predicated region
    $region10: #{tpu_custom_call.1} parent=1 // pred_check
      _
    $region11: #{tpu_custom_call.1} parent=1 // pred_check_branch
      %14 = sbr.rel (0) target = $region13
    $region12: #{tpu_custom_call.1} parent=1 // pred_region
      _
    $region13: #{tpu_custom_call.1} parent=1 // pred_fallthru
      _
    %v15 = vld [vmem:[%s0] sm:$0xff]
    %v16 = vld [vmem:[%s0 + $0x8] sm:$0xff]
    %v17 = vld [vmem:[%s1] sm:$0xff]
    %v18 = vld [vmem:[%s1 + $0x8] sm:$0xff]
    %v19 = vld [vmem:[%s1 + $0x10] sm:$0xff]
    %v20 = vld [vmem:[%s1 + $0x18] sm:$0xff]
    %v21 = vld [vmem:[%s1 + $0x20] sm:$0xff]
    %v22 = vld [vmem:[%s1 + $0x28] sm:$0xff]
    %v23 = vld [vmem:[%s1 + $0x30] sm:$0xff]
    %v24 = vld [vmem:[%s1 + $0x38] sm:$0xff]
    %v25 = vld [vmem:[%s1 + $0x40] sm:$0xff]
    %v26 = vld [vmem:[%s1 + $0x48] sm:$0xff]
    %v27 = vld [vmem:[%s1 + $0x50] sm:$0xff]
    %v28 = vld [vmem:[%s1 + $0x58] sm:$0xff]
    %v29 = vld [vmem:[%s1 + $0x60] sm:$0xff]
    %v30 = vld [vmem:[%s1 + $0x68] sm:$0xff]
    %v31 = vld [vmem:[%s1 + $0x70] sm:$0xff]
    %v32 = vld [vmem:[%s1 + $0x78] sm:$0xff]
    %33 = vmatprep.subr.mxu0 0.0
    %34 = vmatpush1.msra.mxu0 %v17
    %35 = vmatprep.subr.mxu0 0.0
    %36 = vmatpush1.msra.mxu0 %v18
    %37 = vmatprep.subr.mxu0 0.0
    %38 = vmatpush1.msra.mxu0 %v19
    %39 = vmatprep.subr.mxu0 0.0
    %40 = vmatpush1.msra.mxu0 %v20
    %41 = vmatprep.subr.mxu0 0.0
    %42 = vmatpush1.msra.mxu0 %v21
    %43 = vmatprep.subr.mxu0 0.0
    %44 = vmatpush1.msra.mxu0 %v22
    %45 = vmatprep.subr.mxu0 0.0
    %46 = vmatpush1.msra.mxu0 %v23
    %47 = vmatprep.subr.mxu0 0.0
    %48 = vmatpush1.msra.mxu0 %v24
    %49 = vmatprep.subr.mxu0 0.0
    %50 = vmatpush1.msra.mxu0 %v25
    %51 = vmatprep.subr.mxu0 0.0
    %52 = vmatpush1.msra.mxu0 %v26
    %53 = vmatprep.subr.mxu0 0.0
    %54 = vmatpush1.msra.mxu0 %v27
    %55 = vmatprep.subr.mxu0 0.0
    %56 = vmatpush1.msra.mxu0 %v28
    %57 = vmatprep.subr.mxu0 0.0
    %58 = vmatpush1.msra.mxu0 %v29
    %59 = vmatprep.subr.mxu0 0.0
    %60 = vmatpush1.msra.mxu0 %v30
    %61 = vmatprep.subr.mxu0 0.0
    %62 = vmatpush1.msra.mxu0 %v31
    %63 = vmatprep.subr.mxu0 0.0
    %64 = vmatpush1.msra.mxu0 %v32
    %65 = vmatprep.subr.mxu0 0.0
    %66 = vmatpush1.msra.mxu0 0.0
    %67 = vmatprep.subr.mxu0 0.0
    %68 = vmatpush1.msra.mxu0 0.0
    %69 = vmatprep.subr.mxu0 0.0
    %70 = vmatpush1.msra.mxu0 0.0
    %71 = vmatprep.subr.mxu0 0.0
    %72 = vmatpush1.msra.mxu0 0.0
    %73 = vmatprep.subr.mxu0 0.0
    %74 = vmatpush1.msra.mxu0 0.0
    %75 = vmatprep.subr.mxu0 0.0
    %76 = vmatpush1.msra.mxu0 0.0
    %77 = vmatprep.subr.mxu0 0.0
    %78 = vmatpush1.msra.mxu0 0.0
    %79 = vmatprep.subr.mxu0 0.0
    %80 = vmatpush1.msra.mxu0 0.0
    %81 = vmatprep.subr.mxu0 0.0
    %82 = vmatpush1.msra.mxu0 0.0
    %83 = vmatprep.subr.mxu0 0.0
    %84 = vmatpush1.msra.mxu0 0.0
    %85 = vmatprep.subr.mxu0 0.0
    %86 = vmatpush1.msra.mxu0 0.0
    %87 = vmatprep.subr.mxu0 0.0
    %88 = vmatpush1.msra.mxu0 0.0
    %89 = vmatprep.subr.mxu0 0.0
    %90 = vmatpush1.msra.mxu0 0.0
    %91 = vmatprep.subr.mxu0 0.0
    %92 = vmatpush1.msra.mxu0 0.0
    %93 = vmatprep.subr.mxu0 0.0
    %94 = vmatpush1.msra.mxu0 0.0
    %95 = vmatprep.subr.mxu0 0.0
    %96 = vmatpush1.msra.mxu0 0.0
    %97 = vmatprep.mubr.f32.mxu0 0.0
    %98 = vmatmul.mubr.f32.gmra.mrb[0].mxu0 %v15
    %v99 = vpop.f32.mrb[0].mxu0
    %v100 = vadd.f32 0.0, %v99
    %v101 = vpop.f32.mrb[0].mxu0
    %102 = vmatprep.mubr.f32.mxu0 0.0
    %103 = vmatmul.mubr.f32.gmra.mrb[0].mxu0 %v16
    %v104 = vpop.f32.mrb[0].mxu0
    %v105 = vadd.f32 0.0, %v104
    %v106 = vpop.f32.mrb[0].mxu0
    %107 = vdwg.mxu0
    %vm108 = vcmp.ge.f32.partialorder 0.0, 0.25
    %v109 = vsel %vm108, 1, 0
    %v110 = vcvt.s32.f32 %v109
    %v111 = vadd.f32 %v100, 0.0
    %v112 = vmul.f32 %v111, 0.60653067
    %v113 = vadd.f32 %v110, 0.0
    %v114 = vmul.f32 %v113, 0.60653067
    %v115 = vmul.f32 %v112, 1.3591409
    %v116 = vmul.f32 %v114, -0.67957044
    %v117 = vadd.f32 %v115, %v116
    %vm118 = vcmp.ge.f32.partialorder %v117, 0.25
    %v119 = vsel %vm118, 1, 0
    %v120 = vcvt.s32.f32 %v119
    %v121 = vadd.f32 %v112, %v112
    %v123 = vrot.slane %v100, 1
    %v125 = vadd.f32 %v121, %v123
    %v126 = vmul.f32 %v125, 0.60653067
    %v127 = vadd.f32 %v112, %v123
    %v128 = vmul.f32 %v127, 0.60653067
    %v129 = vadd.f32 %v114, %v114
    %v130 = vadd.f32 %v129, %v120
    %v131 = vmul.f32 %v130, 0.60653067
    %v132 = vadd.f32 %v114, %v120
    %v133 = vmul.f32 %v132, 0.60653067
    %v134 = vmul.f32 %v126, 1.3591409
    %v135 = vmul.f32 %v131, -0.67957044
    %v136 = vadd.f32 %v134, %v135
    %vm137 = vcmp.ge.f32.partialorder %v136, 0.25
    %v138 = vsel %vm137, 1, 0
    %v139 = vcvt.s32.f32 %v138
    %v140 = vadd.f32 %v126, %v128
    %v141 = vrot.slane %v100, 2
    %v143 = vadd.f32 %v140, %v141
    %v144 = vmul.f32 %v143, 0.60653067
    %v145 = vadd.f32 %v128, %v141
    %v146 = vmul.f32 %v145, 0.60653067
    %v147 = vadd.f32 %v131, %v133
    %v148 = vadd.f32 %v147, %v139
    %v149 = vmul.f32 %v148, 0.60653067
    %v150 = vadd.f32 %v133, %v139
    %v151 = vmul.f32 %v150, 0.60653067
    %v152 = vmul.f32 %v144, 1.3591409
    %v153 = vmul.f32 %v149, -0.67957044
    %v154 = vadd.f32 %v152, %v153
    %vm155 = vcmp.ge.f32.partialorder %v154, 0.25
    %v156 = vsel %vm155, 1, 0
    %v157 = vcvt.s32.f32 %v156
    %v158 = vadd.f32 %v144, %v146
    %v159 = vrot.slane %v100, 3
    %v161 = vadd.f32 %v158, %v159
    %v162 = vmul.f32 %v161, 0.60653067
    %v163 = vadd.f32 %v146, %v159
    %v164 = vmul.f32 %v163, 0.60653067
    %v165 = vadd.f32 %v149, %v151
    %v166 = vadd.f32 %v165, %v157
    %v167 = vmul.f32 %v166, 0.60653067
    %v168 = vadd.f32 %v151, %v157
    %v169 = vmul.f32 %v168, 0.60653067
    %v170 = vmul.f32 %v162, 1.3591409
    %v171 = vmul.f32 %v167, -0.67957044
    %v172 = vadd.f32 %v170, %v171
    %vm173 = vcmp.ge.f32.partialorder %v172, 0.25
    %v174 = vsel %vm173, 1, 0
    %v175 = vcvt.s32.f32 %v174
    %v176 = vadd.f32 %v162, %v164
    %v177 = vrot.slane %v100, 4
    %v179 = vadd.f32 %v176, %v177
    %v180 = vmul.f32 %v179, 0.60653067
    %v181 = vadd.f32 %v164, %v177
    %v182 = vmul.f32 %v181, 0.60653067
    %v183 = vadd.f32 %v167, %v169
    %v184 = vadd.f32 %v183, %v175
    %v185 = vmul.f32 %v184, 0.60653067
    %v186 = vadd.f32 %v169, %v175
    %v187 = vmul.f32 %v186, 0.60653067
    %v188 = vmul.f32 %v180, 1.3591409
    %v189 = vmul.f32 %v185, -0.67957044
    %v190 = vadd.f32 %v188, %v189
    %vm191 = vcmp.ge.f32.partialorder %v190, 0.25
    %v192 = vsel %vm191, 1, 0
    %v193 = vcvt.s32.f32 %v192
    %v194 = vadd.f32 %v180, %v182
    %v195 = vrot.slane %v100, 5
    %v197 = vadd.f32 %v194, %v195
    %v198 = vmul.f32 %v197, 0.60653067
    %v199 = vadd.f32 %v182, %v195
    %v200 = vmul.f32 %v199, 0.60653067
    %v201 = vadd.f32 %v185, %v187
    %v202 = vadd.f32 %v201, %v193
    %v203 = vmul.f32 %v202, 0.60653067
    %v204 = vadd.f32 %v187, %v193
    %v205 = vmul.f32 %v204, 0.60653067
    %v206 = vmul.f32 %v198, 1.3591409
    %v207 = vmul.f32 %v203, -0.67957044
    %v208 = vadd.f32 %v206, %v207
    %vm209 = vcmp.ge.f32.partialorder %v208, 0.25
    %v210 = vsel %vm209, 1, 0
    %v211 = vcvt.s32.f32 %v210
    %v212 = vadd.f32 %v198, %v200
    %v213 = vrot.slane %v100, 6
    %v215 = vadd.f32 %v212, %v213
    %v216 = vmul.f32 %v215, 0.60653067
    %v217 = vadd.f32 %v200, %v213
    %v218 = vmul.f32 %v217, 0.60653067
    %v219 = vadd.f32 %v203, %v205
    %v220 = vadd.f32 %v219, %v211
    %v221 = vmul.f32 %v220, 0.60653067
    %v222 = vadd.f32 %v205, %v211
    %v223 = vmul.f32 %v222, 0.60653067
    %v224 = vmul.f32 %v216, 1.3591409
    %v225 = vmul.f32 %v221, -0.67957044
    %v226 = vadd.f32 %v224, %v225
    %vm227 = vcmp.ge.f32.partialorder %v226, 0.25
    %v228 = vsel %vm227, 1, 0
    %v229 = vcvt.s32.f32 %v228
    %v230 = vadd.f32 %v216, %v218
    %v231 = vrot.slane %v100, 7
    %v233 = vadd.f32 %v230, %v231
    %v234 = vmul.f32 %v233, 0.60653067
    %v235 = vadd.f32 %v218, %v231
    %v236 = vmul.f32 %v235, 0.60653067
    %v237 = vadd.f32 %v221, %v223
    %v238 = vadd.f32 %v237, %v229
    %v239 = vmul.f32 %v238, 0.60653067
    %v240 = vadd.f32 %v223, %v229
    %v241 = vmul.f32 %v240, 0.60653067
    %v242 = vmul.f32 %v234, 1.3591409
    %v243 = vmul.f32 %v239, -0.67957044
    %v244 = vadd.f32 %v242, %v243
    %vm245 = vcmp.ge.f32.partialorder %v244, 0.25
    %v246 = vsel %vm245, 1, 0
    %v247 = vcvt.s32.f32 %v246
    %v248 = vadd.f32 %v234, %v236
    %v249 = vadd.f32 %v248, %v105
    %v250 = vmul.f32 %v249, 0.60653067
    %v251 = vadd.f32 %v236, %v105
    %v252 = vmul.f32 %v251, 0.60653067
    %v253 = vadd.f32 %v239, %v241
    %v254 = vadd.f32 %v253, %v247
    %v255 = vmul.f32 %v254, 0.60653067
    %v256 = vadd.f32 %v241, %v247
    %v257 = vmul.f32 %v256, 0.60653067
    %v258 = vmul.f32 %v250, 1.3591409
    %v259 = vmul.f32 %v255, -0.67957044
    %v260 = vadd.f32 %v258, %v259
    %vm261 = vcmp.ge.f32.partialorder %v260, 0.25
    %v262 = vsel %vm261, 1, 0
    %v263 = vcvt.s32.f32 %v262
    %v264 = vadd.f32 %v250, %v252
    %v266 = vrot.slane %v105, 1
    %v268 = vadd.f32 %v264, %v266
    %v269 = vmul.f32 %v268, 0.60653067
    %v270 = vadd.f32 %v252, %v266
    %v271 = vmul.f32 %v270, 0.60653067
    %v272 = vadd.f32 %v255, %v257
    %v273 = vadd.f32 %v272, %v263
    %v274 = vmul.f32 %v273, 0.60653067
    %v275 = vadd.f32 %v257, %v263
    %v276 = vmul.f32 %v275, 0.60653067
    %v277 = vmul.f32 %v269, 1.3591409
    %v278 = vmul.f32 %v274, -0.67957044
    %v279 = vadd.f32 %v277, %v278
    %vm280 = vcmp.ge.f32.partialorder %v279, 0.25
    %v281 = vsel %vm280, 1, 0
    %v282 = vcvt.s32.f32 %v281
    %v283 = vadd.f32 %v269, %v271
    %v284 = vrot.slane %v105, 2
    %v286 = vadd.f32 %v283, %v284
    %v287 = vmul.f32 %v286, 0.60653067
    %v288 = vadd.f32 %v271, %v284
    %v289 = vmul.f32 %v288, 0.60653067
    %v290 = vadd.f32 %v274, %v276
    %v291 = vadd.f32 %v290, %v282
    %v292 = vmul.f32 %v291, 0.60653067
    %v293 = vadd.f32 %v276, %v282
    %v294 = vmul.f32 %v293, 0.60653067
    %v295 = vmul.f32 %v287, 1.3591409
    %v296 = vmul.f32 %v292, -0.67957044
    %v297 = vadd.f32 %v295, %v296
    %vm298 = vcmp.ge.f32.partialorder %v297, 0.25
    %v299 = vsel %vm298, 1, 0
    %v300 = vcvt.s32.f32 %v299
    %v301 = vadd.f32 %v287, %v289
    %v302 = vrot.slane %v105, 3
    %v304 = vadd.f32 %v301, %v302
    %v305 = vmul.f32 %v304, 0.60653067
    %v306 = vadd.f32 %v289, %v302
    %v307 = vmul.f32 %v306, 0.60653067
    %v308 = vadd.f32 %v292, %v294
    %v309 = vadd.f32 %v308, %v300
    %v310 = vmul.f32 %v309, 0.60653067
    %v311 = vadd.f32 %v294, %v300
    %v312 = vmul.f32 %v311, 0.60653067
    %v313 = vmul.f32 %v305, 1.3591409
    %v314 = vmul.f32 %v310, -0.67957044
    %v315 = vadd.f32 %v313, %v314
    %vm316 = vcmp.ge.f32.partialorder %v315, 0.25
    %v317 = vsel %vm316, 1, 0
    %v318 = vcvt.s32.f32 %v317
    %v319 = vadd.f32 %v305, %v307
    %v320 = vrot.slane %v105, 4
    %v322 = vadd.f32 %v319, %v320
    %v323 = vmul.f32 %v322, 0.60653067
    %v324 = vadd.f32 %v307, %v320
    %v325 = vmul.f32 %v324, 0.60653067
    %v326 = vadd.f32 %v310, %v312
    %v327 = vadd.f32 %v326, %v318
    %v328 = vmul.f32 %v327, 0.60653067
    %v329 = vadd.f32 %v312, %v318
    %v330 = vmul.f32 %v329, 0.60653067
    %v331 = vmul.f32 %v323, 1.3591409
    %v332 = vmul.f32 %v328, -0.67957044
    %v333 = vadd.f32 %v331, %v332
    %vm334 = vcmp.ge.f32.partialorder %v333, 0.25
    %v335 = vsel %vm334, 1, 0
    %v336 = vcvt.s32.f32 %v335
    %v337 = vadd.f32 %v323, %v325
    %v338 = vrot.slane %v105, 5
    %v340 = vadd.f32 %v337, %v338
    %v341 = vmul.f32 %v340, 0.60653067
    %v342 = vadd.f32 %v325, %v338
    %v343 = vmul.f32 %v342, 0.60653067
    %v344 = vadd.f32 %v328, %v330
    %v345 = vadd.f32 %v344, %v336
    %v346 = vmul.f32 %v345, 0.60653067
    %v347 = vadd.f32 %v330, %v336
    %v348 = vmul.f32 %v347, 0.60653067
    %v349 = vmul.f32 %v341, 1.3591409
    %v350 = vmul.f32 %v346, -0.67957044
    %v351 = vadd.f32 %v349, %v350
    %vm352 = vcmp.ge.f32.partialorder %v351, 0.25
    %v353 = vsel %vm352, 1, 0
    %v354 = vcvt.s32.f32 %v353
    %v355 = vadd.f32 %v341, %v343
    %v356 = vrot.slane %v105, 6
    %v358 = vadd.f32 %v355, %v356
    %v359 = vmul.f32 %v358, 0.60653067
    %v360 = vadd.f32 %v346, %v348
    %v361 = vadd.f32 %v360, %v354
    %v362 = vmul.f32 %v361, 0.60653067
    %v363 = vmul.f32 %v359, 1.3591409
    %v364 = vmul.f32 %v362, -0.67957044
    %v365 = vadd.f32 %v363, %v364
    %vm366 = vcmp.ge.f32.partialorder %v365, 0.25
    %v367 = vsel %vm366, 1, 0
    %v368 = vcvt.s32.f32 %v367
    %v370 = vrot.slane %v120, 7
    %v373 = vrot.slane %v139, 6
    %v376 = vrot.slane %v157, 5
    %v379 = vrot.slane %v175, 4
    %v382 = vrot.slane %v193, 3
    %v385 = vrot.slane %v211, 2
    %v388 = vrot.slane %v229, 1
    %v391 = vrot.slane %v263, 7
    %v394 = vrot.slane %v282, 6
    %v397 = vrot.slane %v300, 5
    %v400 = vrot.slane %v318, 4
    %v403 = vrot.slane %v336, 3
    %v406 = vrot.slane %v354, 2
    %v409 = vrot.slane %v368, 1
    %vm411 = vcmask 1040384
    %v412 = vsel %vm411, %v110, %v370
    %vm413 = vcmask 1041408
    %v414 = vsel %vm413, %v412, %v373
    %vm415 = vcmask 1042432
    %v416 = vsel %vm415, %v414, %v376
    %vm417 = vcmask 1043456
    %v418 = vsel %vm417, %v416, %v379
    %vm419 = vcmask 1044480
    %v420 = vsel %vm419, %v418, %v382
    %vm421 = vcmask 1045504
    %v422 = vsel %vm421, %v420, %v385
    %vm423 = vcmask 1046528
    %v424 = vsel %vm423, %v422, %v388
    %v425 = vsel %vm411, %v247, %v391
    %v426 = vsel %vm413, %v425, %v394
    %v427 = vsel %vm415, %v426, %v397
    %v428 = vsel %vm417, %v427, %v400
    %v429 = vsel %vm419, %v428, %v403
    %v430 = vsel %vm421, %v429, %v406
    %v431 = vsel %vm423, %v430, %v409
    %v432 = vld [vmem:[%s2] sm:$0xff]
    %v433 = vld [vmem:[%s2 + $0x8] sm:$0xff]
    %v434 = vld [vmem:[%s2 + $0x10] sm:$0xff]
    %v435 = vld [vmem:[%s2 + $0x18] sm:$0xff]
    %v436 = vld [vmem:[%s2 + $0x20] sm:$0xff]
    %v437 = vld [vmem:[%s2 + $0x28] sm:$0xff]
    %v438 = vld [vmem:[%s2 + $0x30] sm:$0xff]
    %v439 = vld [vmem:[%s2 + $0x38] sm:$0xff]
    %vm440 = vcmask 523264
    %v442 = vsel %vm440, %v424, 0
    %v445 = vsel %vm440, %v431, 0
    %447 = vmatprep.subr.mxu0 0.0
    %448 = vmatpush1.msra.mxu0 %v432
    %449 = vmatprep.subr.mxu0 0.0
    %450 = vmatpush1.msra.mxu0 %v433
    %451 = vmatprep.subr.mxu0 0.0
    %452 = vmatpush1.msra.mxu0 %v434
    %453 = vmatprep.subr.mxu0 0.0
    %454 = vmatpush1.msra.mxu0 %v435
    %455 = vmatprep.subr.mxu0 0.0
    %456 = vmatpush1.msra.mxu0 %v436
    %457 = vmatprep.subr.mxu0 0.0
    %458 = vmatpush1.msra.mxu0 %v437
    %459 = vmatprep.subr.mxu0 0.0
    %460 = vmatpush1.msra.mxu0 %v438
    %461 = vmatprep.subr.mxu0 0.0
    %462 = vmatpush1.msra.mxu0 %v439
    %463 = vmatprep.subr.mxu0 0.0
    %464 = vmatpush1.msra.mxu0 0.0
    %465 = vmatprep.subr.mxu0 0.0
    %466 = vmatpush1.msra.mxu0 0.0
    %467 = vmatprep.subr.mxu0 0.0
    %468 = vmatpush1.msra.mxu0 0.0
    %469 = vmatprep.subr.mxu0 0.0
    %470 = vmatpush1.msra.mxu0 0.0
    %471 = vmatprep.subr.mxu0 0.0
    %472 = vmatpush1.msra.mxu0 0.0
    %473 = vmatprep.subr.mxu0 0.0
    %474 = vmatpush1.msra.mxu0 0.0
    %475 = vmatprep.subr.mxu0 0.0
    %476 = vmatpush1.msra.mxu0 0.0
    %477 = vmatprep.subr.mxu0 0.0
    %478 = vmatpush1.msra.mxu0 0.0
    %479 = vmatprep.subr.mxu0 0.0
    %480 = vmatpush1.msra.mxu0 0.0
    %481 = vmatprep.subr.mxu0 0.0
    %482 = vmatpush1.msra.mxu0 0.0
    %483 = vmatprep.subr.mxu0 0.0
    %484 = vmatpush1.msra.mxu0 0.0
    %485 = vmatprep.subr.mxu0 0.0
    %486 = vmatpush1.msra.mxu0 0.0
    %487 = vmatprep.subr.mxu0 0.0
    %488 = vmatpush1.msra.mxu0 0.0
    %489 = vmatprep.subr.mxu0 0.0
    %490 = vmatpush1.msra.mxu0 0.0
    %491 = vmatprep.subr.mxu0 0.0
    %492 = vmatpush1.msra.mxu0 0.0
    %493 = vmatprep.subr.mxu0 0.0
    %494 = vmatpush1.msra.mxu0 0.0
    %495 = vmatprep.subr.mxu0 0.0
    %496 = vmatpush1.msra.mxu0 0.0
    %497 = vmatprep.subr.mxu0 0.0
    %498 = vmatpush1.msra.mxu0 0.0
    %499 = vmatprep.subr.mxu0 0.0
    %500 = vmatpush1.msra.mxu0 0.0
    %501 = vmatprep.subr.mxu0 0.0
    %502 = vmatpush1.msra.mxu0 0.0
    %503 = vmatprep.subr.mxu0 0.0
    %504 = vmatpush1.msra.mxu0 0.0
    %505 = vmatprep.subr.mxu0 0.0
    %506 = vmatpush1.msra.mxu0 0.0
    %507 = vmatprep.subr.mxu0 0.0
    %508 = vmatpush1.msra.mxu0 0.0
    %509 = vmatprep.subr.mxu0 0.0
    %510 = vmatpush1.msra.mxu0 0.0
    %511 = vmatprep.mubr.f32.mxu0 0.0
    %512 = vmatmul.mubr.f32.gmra.mrb[0].mxu0 %v442
    %v513 = vpop.f32.mrb[0].mxu0
    %v514 = vadd.f32 0.0, %v513
    %v515 = vpop.f32.mrb[0].mxu0
    %516 = vmatprep.mubr.f32.mxu0 0.0
    %517 = vmatmul.mubr.f32.gmra.mrb[0].mxu0 %v445
    %v518 = vpop.f32.mrb[0].mxu0
    %v519 = vadd.f32 0.0, %v518
    %v520 = vpop.f32.mrb[0].mxu0
    %521 = vdwg.mxu0
    %v522 = vadd.f32 %v514, 0.0
    %v523 = vmul.f32 %v522, 0.60653067
    %v524 = vmul.f32 %v523, 1.3591409
    %v525 = vadd.f32 %v524, %v116
    %vm526 = vcmp.ge.f32.partialorder %v525, 0.25
    %v527 = vsel %vm526, 1, 0
    %v528 = vcvt.s32.f32 %v527
    %v529 = vadd.f32 %v523, %v523
    %v531 = vrot.slane %v514, 1
    %v533 = vadd.f32 %v529, %v531
    %v534 = vmul.f32 %v533, 0.60653067
    %v535 = vadd.f32 %v523, %v531
    %v536 = vmul.f32 %v535, 0.60653067
    %v537 = vadd.f32 %v129, %v528
    %v538 = vmul.f32 %v537, 0.60653067
    %v539 = vadd.f32 %v114, %v528
    %v540 = vmul.f32 %v539, 0.60653067
    %v541 = vmul.f32 %v534, 1.3591409
    %v542 = vmul.f32 %v538, -0.67957044
    %v543 = vadd.f32 %v541, %v542
    %vm544 = vcmp.ge.f32.partialorder %v543, 0.25
    %v545 = vsel %vm544, 1, 0
    %v546 = vcvt.s32.f32 %v545
    %v547 = vadd.f32 %v534, %v536
    %v548 = vrot.slane %v514, 2
    %v550 = vadd.f32 %v547, %v548
    %v551 = vmul.f32 %v550, 0.60653067
    %v552 = vadd.f32 %v536, %v548
    %v553 = vmul.f32 %v552, 0.60653067
    %v554 = vadd.f32 %v538, %v540
    %v555 = vadd.f32 %v554, %v546
    %v556 = vmul.f32 %v555, 0.60653067
    %v557 = vadd.f32 %v540, %v546
    %v558 = vmul.f32 %v557, 0.60653067
    %v559 = vmul.f32 %v551, 1.3591409
    %v560 = vmul.f32 %v556, -0.67957044
    %v561 = vadd.f32 %v559, %v560
    %vm562 = vcmp.ge.f32.partialorder %v561, 0.25
    %v563 = vsel %vm562, 1, 0
    %v564 = vcvt.s32.f32 %v563
    %v565 = vadd.f32 %v551, %v553
    %v566 = vrot.slane %v514, 3
    %v568 = vadd.f32 %v565, %v566
    %v569 = vmul.f32 %v568, 0.60653067
    %v570 = vadd.f32 %v553, %v566
    %v571 = vmul.f32 %v570, 0.60653067
    %v572 = vadd.f32 %v556, %v558
    %v573 = vadd.f32 %v572, %v564
    %v574 = vmul.f32 %v573, 0.60653067
    %v575 = vadd.f32 %v558, %v564
    %v576 = vmul.f32 %v575, 0.60653067
    %v577 = vmul.f32 %v569, 1.3591409
    %v578 = vmul.f32 %v574, -0.67957044
    %v579 = vadd.f32 %v577, %v578
    %vm580 = vcmp.ge.f32.partialorder %v579, 0.25
    %v581 = vsel %vm580, 1, 0
    %v582 = vcvt.s32.f32 %v581
    %v583 = vadd.f32 %v569, %v571
    %v584 = vrot.slane %v514, 4
    %v586 = vadd.f32 %v583, %v584
    %v587 = vmul.f32 %v586, 0.60653067
    %v588 = vadd.f32 %v571, %v584
    %v589 = vmul.f32 %v588, 0.60653067
    %v590 = vadd.f32 %v574, %v576
    %v591 = vadd.f32 %v590, %v582
    %v592 = vmul.f32 %v591, 0.60653067
    %v593 = vadd.f32 %v576, %v582
    %v594 = vmul.f32 %v593, 0.60653067
    %v595 = vmul.f32 %v587, 1.3591409
    %v596 = vmul.f32 %v592, -0.67957044
    %v597 = vadd.f32 %v595, %v596
    %vm598 = vcmp.ge.f32.partialorder %v597, 0.25
    %v599 = vsel %vm598, 1, 0
    %v600 = vcvt.s32.f32 %v599
    %v601 = vadd.f32 %v587, %v589
    %v602 = vrot.slane %v514, 5
    %v604 = vadd.f32 %v601, %v602
    %v605 = vmul.f32 %v604, 0.60653067
    %v606 = vadd.f32 %v589, %v602
    %v607 = vmul.f32 %v606, 0.60653067
    %v608 = vadd.f32 %v592, %v594
    %v609 = vadd.f32 %v608, %v600
    %v610 = vmul.f32 %v609, 0.60653067
    %v611 = vadd.f32 %v594, %v600
    %v612 = vmul.f32 %v611, 0.60653067
    %v613 = vmul.f32 %v605, 1.3591409
    %v614 = vmul.f32 %v610, -0.67957044
    %v615 = vadd.f32 %v613, %v614
    %vm616 = vcmp.ge.f32.partialorder %v615, 0.25
    %v617 = vsel %vm616, 1, 0
    %v618 = vcvt.s32.f32 %v617
    %v619 = vadd.f32 %v605, %v607
    %v620 = vrot.slane %v514, 6
    %v622 = vadd.f32 %v619, %v620
    %v623 = vmul.f32 %v622, 0.60653067
    %v624 = vadd.f32 %v607, %v620
    %v625 = vmul.f32 %v624, 0.60653067
    %v626 = vadd.f32 %v610, %v612
    %v627 = vadd.f32 %v626, %v618
    %v628 = vmul.f32 %v627, 0.60653067
    %v629 = vadd.f32 %v612, %v618
    %v630 = vmul.f32 %v629, 0.60653067
    %v631 = vmul.f32 %v623, 1.3591409
    %v632 = vmul.f32 %v628, -0.67957044
    %v633 = vadd.f32 %v631, %v632
    %vm634 = vcmp.ge.f32.partialorder %v633, 0.25
    %v635 = vsel %vm634, 1, 0
    %v636 = vcvt.s32.f32 %v635
    %v637 = vadd.f32 %v623, %v625
    %v638 = vrot.slane %v514, 7
    %v640 = vadd.f32 %v637, %v638
    %v641 = vmul.f32 %v640, 0.60653067
    %v642 = vadd.f32 %v625, %v638
    %v643 = vmul.f32 %v642, 0.60653067
    %v644 = vadd.f32 %v628, %v630
    %v645 = vadd.f32 %v644, %v636
    %v646 = vmul.f32 %v645, 0.60653067
    %v647 = vadd.f32 %v630, %v636
    %v648 = vmul.f32 %v647, 0.60653067
    %v649 = vmul.f32 %v641, 1.3591409
    %v650 = vmul.f32 %v646, -0.67957044
    %v651 = vadd.f32 %v649, %v650
    %vm652 = vcmp.ge.f32.partialorder %v651, 0.25
    %v653 = vsel %vm652, 1, 0
    %v654 = vcvt.s32.f32 %v653
    %v655 = vadd.f32 %v641, %v643
    %v656 = vadd.f32 %v655, %v519
    %v657 = vmul.f32 %v656, 0.60653067
    %v658 = vadd.f32 %v643, %v519
    %v659 = vmul.f32 %v658, 0.60653067
    %v660 = vadd.f32 %v646, %v648
    %v661 = vadd.f32 %v660, %v654
    %v662 = vmul.f32 %v661, 0.60653067
    %v663 = vadd.f32 %v648, %v654
    %v664 = vmul.f32 %v663, 0.60653067
    %v665 = vmul.f32 %v657, 1.3591409
    %v666 = vmul.f32 %v662, -0.67957044
    %v667 = vadd.f32 %v665, %v666
    %vm668 = vcmp.ge.f32.partialorder %v667, 0.25
    %v669 = vsel %vm668, 1, 0
    %v670 = vcvt.s32.f32 %v669
    %v671 = vadd.f32 %v657, %v659
    %v673 = vrot.slane %v519, 1
    %v675 = vadd.f32 %v671, %v673
    %v676 = vmul.f32 %v675, 0.60653067
    %v677 = vadd.f32 %v659, %v673
    %v678 = vmul.f32 %v677, 0.60653067
    %v679 = vadd.f32 %v662, %v664
    %v680 = vadd.f32 %v679, %v670
    %v681 = vmul.f32 %v680, 0.60653067
    %v682 = vadd.f32 %v664, %v670
    %v683 = vmul.f32 %v682, 0.60653067
    %v684 = vmul.f32 %v676, 1.3591409
    %v685 = vmul.f32 %v681, -0.67957044
    %v686 = vadd.f32 %v684, %v685
    %vm687 = vcmp.ge.f32.partialorder %v686, 0.25
    %v688 = vsel %vm687, 1, 0
    %v689 = vcvt.s32.f32 %v688
    %v690 = vadd.f32 %v676, %v678
    %v691 = vrot.slane %v519, 2
    %v693 = vadd.f32 %v690, %v691
    %v694 = vmul.f32 %v693, 0.60653067
    %v695 = vadd.f32 %v678, %v691
    %v696 = vmul.f32 %v695, 0.60653067
    %v697 = vadd.f32 %v681, %v683
    %v698 = vadd.f32 %v697, %v689
    %v699 = vmul.f32 %v698, 0.60653067
    %v700 = vadd.f32 %v683, %v689
    %v701 = vmul.f32 %v700, 0.60653067
    %v702 = vmul.f32 %v694, 1.3591409
    %v703 = vmul.f32 %v699, -0.67957044
    %v704 = vadd.f32 %v702, %v703
    %vm705 = vcmp.ge.f32.partialorder %v704, 0.25
    %v706 = vsel %vm705, 1, 0
    %v707 = vcvt.s32.f32 %v706
    %v708 = vadd.f32 %v694, %v696
    %v709 = vrot.slane %v519, 3
    %v711 = vadd.f32 %v708, %v709
    %v712 = vmul.f32 %v711, 0.60653067
    %v713 = vadd.f32 %v696, %v709
    %v714 = vmul.f32 %v713, 0.60653067
    %v715 = vadd.f32 %v699, %v701
    %v716 = vadd.f32 %v715, %v707
    %v717 = vmul.f32 %v716, 0.60653067
    %v718 = vadd.f32 %v701, %v707
    %v719 = vmul.f32 %v718, 0.60653067
    %v720 = vmul.f32 %v712, 1.3591409
    %v721 = vmul.f32 %v717, -0.67957044
    %v722 = vadd.f32 %v720, %v721
    %vm723 = vcmp.ge.f32.partialorder %v722, 0.25
    %v724 = vsel %vm723, 1, 0
    %v725 = vcvt.s32.f32 %v724
    %v726 = vadd.f32 %v712, %v714
    %v727 = vrot.slane %v519, 4
    %v729 = vadd.f32 %v726, %v727
    %v730 = vmul.f32 %v729, 0.60653067
    %v731 = vadd.f32 %v714, %v727
    %v732 = vmul.f32 %v731, 0.60653067
    %v733 = vadd.f32 %v717, %v719
    %v734 = vadd.f32 %v733, %v725
    %v735 = vmul.f32 %v734, 0.60653067
    %v736 = vadd.f32 %v719, %v725
    %v737 = vmul.f32 %v736, 0.60653067
    %v738 = vmul.f32 %v730, 1.3591409
    %v739 = vmul.f32 %v735, -0.67957044
    %v740 = vadd.f32 %v738, %v739
    %vm741 = vcmp.ge.f32.partialorder %v740, 0.25
    %v742 = vsel %vm741, 1, 0
    %v743 = vcvt.s32.f32 %v742
    %v744 = vadd.f32 %v730, %v732
    %v745 = vrot.slane %v519, 5
    %v747 = vadd.f32 %v744, %v745
    %v748 = vmul.f32 %v747, 0.60653067
    %v749 = vadd.f32 %v732, %v745
    %v750 = vmul.f32 %v749, 0.60653067
    %v751 = vadd.f32 %v735, %v737
    %v752 = vadd.f32 %v751, %v743
    %v753 = vmul.f32 %v752, 0.60653067
    %v754 = vadd.f32 %v737, %v743
    %v755 = vmul.f32 %v754, 0.60653067
    %v756 = vmul.f32 %v748, 1.3591409
    %v757 = vmul.f32 %v753, -0.67957044
    %v758 = vadd.f32 %v756, %v757
    %vm759 = vcmp.ge.f32.partialorder %v758, 0.25
    %v760 = vsel %vm759, 1, 0
    %v761 = vcvt.s32.f32 %v760
    %v762 = vadd.f32 %v748, %v750
    %v763 = vrot.slane %v519, 6
    %v765 = vadd.f32 %v762, %v763
    %v766 = vmul.f32 %v765, 0.60653067
    %v767 = vadd.f32 %v753, %v755
    %v768 = vadd.f32 %v767, %v761
    %v769 = vmul.f32 %v768, 0.60653067
    %v770 = vmul.f32 %v766, 1.3591409
    %v771 = vmul.f32 %v769, -0.67957044
    %v772 = vadd.f32 %v770, %v771
    %vm773 = vcmp.ge.f32.partialorder %v772, 0.25
    %v774 = vsel %vm773, 1, 0
    %v775 = vcvt.s32.f32 %v774
    %v777 = vrot.slane %v528, 7
    %v780 = vrot.slane %v546, 6
    %v783 = vrot.slane %v564, 5
    %v786 = vrot.slane %v582, 4
    %v789 = vrot.slane %v600, 3
    %v792 = vrot.slane %v618, 2
    %v795 = vrot.slane %v636, 1
    %v798 = vrot.slane %v670, 7
    %v801 = vrot.slane %v689, 6
    %v804 = vrot.slane %v707, 5
    %v807 = vrot.slane %v725, 4
    %v810 = vrot.slane %v743, 3
    %v813 = vrot.slane %v761, 2
    %v816 = vrot.slane %v775, 1
    %v818 = vsel %vm411, %v110, %v777
    %v819 = vsel %vm413, %v818, %v780
    %v820 = vsel %vm415, %v819, %v783
    %v821 = vsel %vm417, %v820, %v786
    %v822 = vsel %vm419, %v821, %v789
    %v823 = vsel %vm421, %v822, %v792
    %v824 = vsel %vm423, %v823, %v795
    %v825 = vsel %vm411, %v654, %v798
    %v826 = vsel %vm413, %v825, %v801
    %v827 = vsel %vm415, %v826, %v804
    %v828 = vsel %vm417, %v827, %v807
    %v829 = vsel %vm419, %v828, %v810
    %v830 = vsel %vm421, %v829, %v813
    %v831 = vsel %vm423, %v830, %v816
    %vm832 = vcmask 261120
    %833 = vst.msk [vmem:[#allocation2] sm:$0xff] %vm832, %v824
    %834 = vst.msk [vmem:[#allocation2 + $0x8] sm:$0xff] %vm832, %v831
    // Predicated region
    $region14: #{tpu_custom_call.1} parent=1 // pred_check
      _
    $region15: #{tpu_custom_call.1} parent=1 // pred_check_branch
      %836 = sbr.rel (0) target = $region17
    $region16: #{tpu_custom_call.1} parent=1 // pred_region
      %s838 = ssub.s32 256, 256
      %839 = vsyncadd [#allocation3], %s838
      %s840 = sshll.u32 [#allocation2], 4
      %s841 = int_to_ptr.vmem [resolvable:$true] %s840
      %846 = dma.vmem_to_hbm [thread:$0]  %s841, 256, %s3, [#allocation3], 128, 128, 8
    $region17: #{tpu_custom_call.1} parent=1 // pred_fallthru
      _
    // Predicated region
    $region18: #{tpu_custom_call.1} parent=1 // pred_check
      _
    $region19: #{tpu_custom_call.1} parent=1 // pred_check_branch
      %848 = sbr.rel (0) target = $region21
    $region20: #{tpu_custom_call.1} parent=1 // pred_region
      %849 = dma.done [#allocation3], 256
    $region21: #{tpu_custom_call.1} parent=1 // pred_fallthru
      _
    %850 = vsyncpa [#allocation3], 1

</llo_original>
